<compile_context>
chip_gen: v6e
topology: v6e:2x2x1
jax: 0.10.0
libtpu: 0.0.40
codegen_flags: <defaults>
</compile_context>

<pallas_src>
import functools

import jax
import jax.numpy as jnp
from jax.experimental import pallas as pl
from jax.experimental.pallas import tpu as pltpu


def _round_up(x, m):
    return ((x + m - 1) // m) * m


def _geb_kernel(x_ref, v_ref, *rest, hidden, fuse_w12, fuse_out, compute_dtype):
    """One grid step over `tile_n` nodes.

    x_ref: (tile_n, H) scalars; v_ref: (tile_n, 3*H) vectors with lanes laid
    out as [d0 | d1 | d2] (free reshape of (B,N,3,H) -> no HBM transpose).
    `rest` = weights / biases followed by 1 (fused) or 2 output refs.
    """
    if fuse_w12:
        (w12_ref, wu1x_ref, wu1v_ref, bu1_ref,
         wu2x_ref, wu2g_ref, bu2x_ref, bu2g_ref, *outs) = rest
    else:
        (w1_ref, w2_ref, wu1x_ref, wu1v_ref, bu1_ref,
         wu2x_ref, wu2g_ref, bu2x_ref, bu2g_ref, *outs) = rest

    f32 = jnp.float32
    cd = compute_dtype
    # In-VMEM dtype cast (no-op when cd == input dtype): HBM read stays in the
    # input dtype, MXU runs at bf16 rate when requested.
    x = x_ref[...].astype(cd)                         # (tn, H)
    vblk = v_ref[...].astype(cd)                      # (tn, 3H)

    # --- vec1_proj / vec2_proj: one (or two) MXU passes per spatial direction.
    sq = None
    vec2_parts = []
    for d in range(3):
        vd = vblk[:, d * hidden:(d + 1) * hidden]     # free lane-tile pick iff H%128==0
        if fuse_w12:
            pd = jnp.dot(vd, w12_ref[...], preferred_element_type=f32)
            p1 = pd[:, :hidden]                       # 128-aligned lane slices (H%128==0)
            p2 = pd[:, hidden:]
        else:
            p1 = jnp.dot(vd, w1_ref[...], preferred_element_type=f32)
            p2 = jnp.dot(vd, w2_ref[...], preferred_element_type=f32)
        vec2_parts.append(p2)                         # (tn, VOUT), f32
        sq = p1 * p1 if sq is None else sq + p1 * p1

    # vec1 = || vec1_proj(v) ||_2 over the spatial axis (f32).  All-zero rows
    # give exactly 0, matching the masked-zero path of the PyTorch forward.
    # (Ragged-tail garbage rows may become inf/NaN here; their stores are
    #  masked by Pallas so nothing of them ever reaches HBM.)
    # TODO(synk): the PyTorch zero-vector warning is a host-side diagnostic
    #             with no forward-value effect; omitted.
    vec1 = jnp.sqrt(sq)                               # (tn, H)

    # --- update_net(concat([x, vec1])) as split-K / split-N matmuls (no lane
    # concat of the input, no sub-128 slicing of the output).
    h = (jnp.dot(x, wu1x_ref[...], preferred_element_type=f32)
         + jnp.dot(vec1.astype(cd), wu1v_ref[...], preferred_element_type=f32)
         + bu1_ref[...])
    h = h * jax.nn.sigmoid(h)                         # SiLU in f32 (EUP slot)
    hc = h.astype(cd)

    x_new = jnp.dot(hc, wu2x_ref[...], preferred_element_type=f32) + bu2x_ref[...]
    gate = jnp.dot(hc, wu2g_ref[...], preferred_element_type=f32) + bu2g_ref[...]
    gated = [gate * vec2_parts[d] for d in range(3)]  # (tn, VOUT) x 3

    if fuse_out:
        # Single lane-dense slab store: [ x_new | g*v2_d0 | g*v2_d1 | g*v2_d2 ].
        outs[0][...] = jnp.concatenate([x_new] + gated, axis=-1).astype(outs[0].dtype)
    else:
        outs[0][...] = x_new.astype(outs[0].dtype)
        outs[1][...] = jnp.concatenate(gated, axis=-1).astype(outs[1].dtype)


def _default_vmem_limit_bytes():
    # ~3/4 of physical VMEM: ~96 MiB on v5e/v6e (128 MiB), ~48 MiB on v7x (64 MiB).
    try:
        cap = pltpu.get_tpu_info().vmem_capacity_bytes
    except Exception:
        cap = 64 * 1024 * 1024            # conservative (v7x-sized) fallback
    return int(min(cap * 3 // 4, 100 * 1024 * 1024))


def gated_equivariant_block(x, v, params, *, x_out_channels, v_out_channels,
                            tile_n=512, use_bf16_matmul=False, out_dtype=None,
                            single_buffer_weights=False, vmem_limit_bytes=None):
    """x: (B, N, H), v: (B, N, 3, H) -> (x_out (B,N,XOUT), v_out (B,N,3,VOUT)).

    use_bf16_matmul: cast matmul operands to bf16 *inside* the kernel (f32 MXU
      accumulation + f32 epilogue).  Valid on v5e / v6e / v7x.
    out_dtype: output storage dtype (default x.dtype); bf16 halves writeback.
    single_buffer_weights: request pipeline_mode=pl.Buffered(1) for resident
      weights (v7x VMEM headroom at production sizes).
    """
    B, N, H = x.shape
    assert v.shape == (B, N, 3, H)
    BN = B * N
    XOUT, VOUT = x_out_channels, v_out_channels
    out_dtype = x.dtype if out_dtype is None else out_dtype

    w1, w2, wu1, bu1, wu2, bu2 = params
    assert wu1.shape[0] == 2 * H
    inter = wu1.shape[1]

    # ---- host-side prep: free reshapes + tiny O(H^2) weight repacks only ----
    # (no jnp.pad and no activation dtype cast: both would add a full extra
    #  HBM pass over x / v before the kernel even starts)
    x_flat = x.reshape(BN, H)
    v_flat = v.reshape(BN, 3 * H)          # free view; spatial axis folded into lanes

    mm_dtype = jnp.bfloat16 if use_bf16_matmul else x.dtype
    fuse_w12 = (H % 128 == 0)                        # product lane-slice free iff aligned
    fuse_out = not (XOUT % 128 == 0 and VOUT % 128 == 0)

    if fuse_w12:
        w_v = [jnp.concatenate([w1, w2], axis=1).astype(mm_dtype)]  # (H, H+VOUT)
    else:
        w_v = [w1.astype(mm_dtype), w2.astype(mm_dtype)]
    wu1_x = wu1[:H].astype(mm_dtype)                 # (H, inter)  update_net[0] | x
    wu1_v = wu1[H:].astype(mm_dtype)                 # (H, inter)  update_net[0] | vec1
    wu2_x = wu2[:, :XOUT].astype(mm_dtype)           # (inter, XOUT)
    wu2_g = wu2[:, XOUT:].astype(mm_dtype)           # (inter, VOUT)
    bu1_2d = bu1.reshape(1, inter).astype(jnp.float32)
    bu2_x = bu2[:XOUT].reshape(1, XOUT).astype(jnp.float32)
    bu2_g = bu2[XOUT:].reshape(1, VOUT).astype(jnp.float32)

    # ---- node tiling: cdiv grid, ragged tail masked by Pallas (no padding) ----
    if BN <= 8:
        tile_n = BN                                   # single full block
    else:
        # >= 2 grid steps so both v7x TensorCores get work; multiple of 8.
        tile_n = min(tile_n, _round_up(pl.cdiv(BN, 2), 8))
        tile_n = max(8, _round_up(tile_n, 8))
    grid = (pl.cdiv(BN, tile_n),)

    # ---- scheduling hint for XLA ----
    flops = 2 * BN * (3 * H * (H + VOUT) + 2 * H * inter + inter * (XOUT + VOUT))
    transcendentals = BN * (inter + H)                # sigmoid + sqrt
    weights = w_v + [wu1_x, wu1_v, bu1_2d, wu2_x, wu2_g, bu2_x, bu2_g]
    bytes_accessed = (x_flat.size * x_flat.dtype.itemsize
                      + v_flat.size * v_flat.dtype.itemsize
                      + sum(int(w.size) * w.dtype.itemsize for w in weights)
                      + BN * (XOUT + 3 * VOUT) * jnp.dtype(out_dtype).itemsize)
    cost = pl.CostEstimate(flops=int(flops), transcendentals=int(transcendentals),
                           bytes_accessed=int(bytes_accessed))

    # Weights/biases: constant block index -> resident across the grid (never
    # re-DMA'd).  Optionally single-buffered (no double buffer) for v7x VMEM.
    def _const_spec(shape):
        idx = lambda i: (0, 0)
        if single_buffer_weights:
            try:
                return pl.BlockSpec(shape, idx, pipeline_mode=pl.Buffered(1))
            except TypeError:
                pass
        return pl.BlockSpec(shape, idx)

    in_specs = (
        [pl.BlockSpec((tile_n, H), lambda i: (i, 0)),         # x
         pl.BlockSpec((tile_n, 3 * H), lambda i: (i, 0))]     # v (lane-folded)
        + [_const_spec(tuple(w.shape)) for w in w_v]          # w1|w2 (maybe fused)
        + [_const_spec((H, inter)), _const_spec((H, inter)), _const_spec((1, inter)),
           _const_spec((inter, XOUT)), _const_spec((inter, VOUT)),
           _const_spec((1, XOUT)), _const_spec((1, VOUT))])

    if fuse_out:
        out_shape = jax.ShapeDtypeStruct((BN, XOUT + 3 * VOUT), out_dtype)
        out_specs = pl.BlockSpec((tile_n, XOUT + 3 * VOUT), lambda i: (i, 0))
    else:
        out_shape = (jax.ShapeDtypeStruct((BN, XOUT), out_dtype),
                     jax.ShapeDtypeStruct((BN, 3 * VOUT), out_dtype))
        out_specs = (pl.BlockSpec((tile_n, XOUT), lambda i: (i, 0)),
                     pl.BlockSpec((tile_n, 3 * VOUT), lambda i: (i, 0)))

    kernel = functools.partial(_geb_kernel, hidden=H, fuse_w12=fuse_w12,
                               fuse_out=fuse_out, compute_dtype=mm_dtype)
    vmem = _default_vmem_limit_bytes() if vmem_limit_bytes is None else vmem_limit_bytes

    outs = pl.pallas_call(
        kernel,
        out_shape=out_shape,
        grid_spec=pltpu.PrefetchScalarGridSpec(
            num_scalar_prefetch=0,
            grid=grid,
            in_specs=in_specs,
            out_specs=out_specs),
        compiler_params=pltpu.CompilerParams(
            dimension_semantics=("parallel",),
            vmem_limit_bytes=vmem),
        cost_estimate=cost,
    )(x_flat, v_flat, *w_v, wu1_x, wu1_v, bu1_2d, wu2_x, wu2_g, bu2_x, bu2_g)

    if fuse_out:
        x_out = outs[:, :XOUT].reshape(B, N, XOUT)
        v_out = outs[:, XOUT:].reshape(B, N, 3, VOUT)   # free (BN,3V)->(B,N,3,V)
    else:
        xo, vo = outs
        x_out = xo.reshape(B, N, XOUT)
        v_out = vo.reshape(B, N, 3, VOUT)
    return x_out, v_out


def _xavier_uniform(key, shape):
    fan_in, fan_out = shape
    bound = (6.0 / (fan_in + fan_out)) ** 0.5
    return jax.random.uniform(key, shape, jnp.float32, -bound, bound)


def init_params(key, hidden, x_out_channels, v_out_channels, intermediate=None):
    if intermediate is None:
        intermediate = hidden
    k1, k2, k3, k4 = jax.random.split(key, 4)
    w1 = _xavier_uniform(k1, (hidden, hidden))               # vec1_proj (no bias)
    w2 = _xavier_uniform(k2, (hidden, v_out_channels))       # vec2_proj (no bias)
    wu1 = _xavier_uniform(k3, (2 * hidden, intermediate))    # update_net[0]
    bu1 = jnp.zeros((intermediate,), jnp.float32)
    wu2 = _xavier_uniform(k4, (intermediate, x_out_channels + v_out_channels))
    bu2 = jnp.zeros((x_out_channels + v_out_channels,), jnp.float32)
    return (w1, w2, wu1, bu1, wu2, bu2)


def _reference(x, v, params, x_out_channels):
    """Pure-JAX reference of the PyTorch forward (scalar_activation=False)."""
    w1, w2, wu1, bu1, wu2, bu2 = params
    vec1_buffer = jnp.einsum("bnsh,hk->bnsk", v, w1)
    vec1 = jnp.sqrt(jnp.sum(vec1_buffer * vec1_buffer, axis=-2))
    vec2 = jnp.einsum("bnsh,hk->bnsk", v, w2)
    xc = jnp.concatenate([x, vec1], axis=-1)
    h = xc @ wu1 + bu1
    h = h * jax.nn.sigmoid(h)
    out = h @ wu2 + bu2
    x_new = out[..., :x_out_channels]
    gate = out[..., x_out_channels:]
    v_new = gate[:, :, None, :] * vec2
    return x_new, v_new


if __name__ == "__main__":
    key = jax.random.PRNGKey(0)

    # ---- case 1: small demo (fused-output path, unfused w1/w2, 2-step grid) ----
    B, N, H = 2, 8, 32
    XOUT, VOUT = 16, 16
    kx, kv, kp, kp2 = jax.random.split(key, 4)
    x = jax.random.normal(kx, (B, N, H), jnp.float32)
    v = jax.random.normal(kv, (B, N, 3, H), jnp.float32)
    params = init_params(kp, H, XOUT, VOUT)
    x_ref, v_ref = _reference(x, v, params, XOUT)

    x_out, v_out = gated_equivariant_block(
        x, v, params, x_out_channels=XOUT, v_out_channels=VOUT)
    jax.block_until_ready((x_out, v_out))
    assert x_out.shape == (B, N, XOUT) and v_out.shape == (B, N, 3, VOUT)
    assert jnp.allclose(x_out, x_ref, atol=1e-4, rtol=1e-4)
    assert jnp.allclose(v_out, v_ref, atol=1e-4, rtol=1e-4)

    # ---- case 2: ragged node count (BN=14 -> one full block + masked 6-row tail) ----
    Nr = 7
    xr = jax.random.normal(kx, (B, Nr, H), jnp.float32)
    vr = jax.random.normal(kv, (B, Nr, 3, H), jnp.float32)
    xr_ref, vr_ref = _reference(xr, vr, params, XOUT)
    xr_out, vr_out = gated_equivariant_block(
        xr, vr, params, x_out_channels=XOUT, v_out_channels=VOUT)
    jax.block_until_ready((xr_out, vr_out))
    assert jnp.allclose(xr_out, xr_ref, atol=1e-4, rtol=1e-4)
    assert jnp.allclose(vr_out, vr_ref, atol=1e-4, rtol=1e-4)

    # ---- case 3: lane-aligned channels (fused w1|w2, split lane-dense outputs) ----
    H2, XOUT2, VOUT2 = 128, 128, 128
    B2, N2 = 1, 12
    x2 = jax.random.normal(kx, (B2, N2, H2), jnp.float32)
    v2 = jax.random.normal(kv, (B2, N2, 3, H2), jnp.float32)
    params2 = init_params(kp2, H2, XOUT2, VOUT2)
    x2_ref, v2_ref = _reference(x2, v2, params2, XOUT2)
    x2_out, v2_out = gated_equivariant_block(
        x2, v2, params2, x_out_channels=XOUT2, v_out_channels=VOUT2)
    jax.block_until_ready((x2_out, v2_out))
    assert jnp.allclose(x2_out, x2_ref, atol=1e-3, rtol=1e-3)
    assert jnp.allclose(v2_out, v2_ref, atol=1e-3, rtol=1e-3)

    # ---- case 4: bf16-MXU path (in-kernel operand cast) + bf16 outputs ----
    xb, vb = gated_equivariant_block(
        x, v, params, x_out_channels=XOUT, v_out_channels=VOUT,
        use_bf16_matmul=True, out_dtype=jnp.bfloat16)
    jax.block_until_ready((xb, vb))
    assert jnp.allclose(xb.astype(jnp.float32), x_ref, atol=2e-1, rtol=1e-1)
    assert jnp.allclose(vb.astype(jnp.float32), v_ref, atol=2e-1, rtol=1e-1)

    # ---- case 5: v7x single-buffered-resident-weights refinement (safe probe) ----
    try:
        xs, vs = gated_equivariant_block(
            x, v, params, x_out_channels=XOUT, v_out_channels=VOUT,
            single_buffer_weights=True)
        jax.block_until_ready((xs, vs))
        assert jnp.allclose(xs, x_ref, atol=1e-4, rtol=1e-4)
    except Exception:
        pass  # pipeline_mode=pl.Buffered(1) not supported on this jax build

    print("KERNEL_OK")
</pallas_src>

<mosaic_0001>
module attributes {stable_mosaic.version = 11 : i64} {
  func.func @_geb_kernel(%arg0: i32, %arg1: memref<8x32xf32, #tpu.memory_space<vmem>>, %arg2: memref<8x96xf32, #tpu.memory_space<vmem>>, %arg3: memref<32x32xf32, #tpu.memory_space<vmem>>, %arg4: memref<32x16xf32, #tpu.memory_space<vmem>>, %arg5: memref<32x32xf32, #tpu.memory_space<vmem>>, %arg6: memref<32x32xf32, #tpu.memory_space<vmem>>, %arg7: memref<1x32xf32, #tpu.memory_space<vmem>>, %arg8: memref<32x16xf32, #tpu.memory_space<vmem>>, %arg9: memref<32x16xf32, #tpu.memory_space<vmem>>, %arg10: memref<1x16xf32, #tpu.memory_space<vmem>>, %arg11: memref<1x16xf32, #tpu.memory_space<vmem>>, %arg12: memref<8x64xf32, #tpu.memory_space<vmem>>) attributes {dimension_semantics = [#tpu.dimension_semantics<parallel>], iteration_bounds = array<i64: 2>, scalar_prefetch = 0 : i64, scratch_operands = 0 : i64, tpu.core_type = #tpu.core_type<tc>, window_params = [{transform_indices = @transform_0, window_bounds = array<i64: 8, 32>}, {transform_indices = @transform_1, window_bounds = array<i64: 8, 96>}, {pipeline_mode = #tpu.pipeline_mode<synchronous>, transform_indices = @transform_2, window_bounds = array<i64: 32, 32>}, {pipeline_mode = #tpu.pipeline_mode<synchronous>, transform_indices = @transform_3, window_bounds = array<i64: 32, 16>}, {pipeline_mode = #tpu.pipeline_mode<synchronous>, transform_indices = @transform_4, window_bounds = array<i64: 32, 32>}, {pipeline_mode = #tpu.pipeline_mode<synchronous>, transform_indices = @transform_5, window_bounds = array<i64: 32, 32>}, {pipeline_mode = #tpu.pipeline_mode<synchronous>, transform_indices = @transform_6, window_bounds = array<i64: 1, 32>}, {pipeline_mode = #tpu.pipeline_mode<synchronous>, transform_indices = @transform_7, window_bounds = array<i64: 32, 16>}, {pipeline_mode = #tpu.pipeline_mode<synchronous>, transform_indices = @transform_8, window_bounds = array<i64: 32, 16>}, {pipeline_mode = #tpu.pipeline_mode<synchronous>, transform_indices = @transform_9, window_bounds = array<i64: 1, 16>}, {pipeline_mode = #tpu.pipeline_mode<synchronous>, transform_indices = @transform_10, window_bounds = array<i64: 1, 16>}, {transform_indices = @transform_11, window_bounds = array<i64: 8, 64>}]} {
    %c0 = arith.constant 0 : index
    %c0_0 = arith.constant 0 : index
    %0 = vector.load %arg1[%c0, %c0_0] : memref<8x32xf32, #tpu.memory_space<vmem>>, vector<8x32xf32>
    %c0_1 = arith.constant 0 : index
    %c0_2 = arith.constant 0 : index
    %1 = vector.load %arg2[%c0_1, %c0_2] : memref<8x96xf32, #tpu.memory_space<vmem>>, vector<8x96xf32>
    %2 = vector.extract_strided_slice %1 {offsets = [0, 0], sizes = [8, 32], strides = [1, 1]} : vector<8x96xf32> to vector<8x32xf32>
    %c0_3 = arith.constant 0 : index
    %c0_4 = arith.constant 0 : index
    %3 = vector.load %arg3[%c0_3, %c0_4] : memref<32x32xf32, #tpu.memory_space<vmem>>, vector<32x32xf32>
    %cst = arith.constant dense<0.000000e+00> : vector<8x32xf32>
    %4 = tpu.matmul %2, %3, %cst {dimension_numbers = #tpu.dot_dimension_numbers<[1], [0], [0], [1], [0, 0, 1, 1], [], []>} : vector<8x32xf32>, vector<32x32xf32>, vector<8x32xf32> -> vector<8x32xf32>
    %c0_5 = arith.constant 0 : index
    %c0_6 = arith.constant 0 : index
    %5 = vector.load %arg4[%c0_5, %c0_6] : memref<32x16xf32, #tpu.memory_space<vmem>>, vector<32x16xf32>
    %cst_7 = arith.constant dense<0.000000e+00> : vector<8x16xf32>
    %6 = tpu.matmul %2, %5, %cst_7 {dimension_numbers = #tpu.dot_dimension_numbers<[1], [0], [0], [1], [0, 0, 1, 1], [], []>} : vector<8x32xf32>, vector<32x16xf32>, vector<8x16xf32> -> vector<8x16xf32>
    %7 = arith.mulf %4, %4 : vector<8x32xf32>
    %8 = vector.extract_strided_slice %1 {offsets = [0, 32], sizes = [8, 32], strides = [1, 1]} : vector<8x96xf32> to vector<8x32xf32>
    %c0_8 = arith.constant 0 : index
    %c0_9 = arith.constant 0 : index
    %9 = vector.load %arg3[%c0_8, %c0_9] : memref<32x32xf32, #tpu.memory_space<vmem>>, vector<32x32xf32>
    %cst_10 = arith.constant dense<0.000000e+00> : vector<8x32xf32>
    %10 = tpu.matmul %8, %9, %cst_10 {dimension_numbers = #tpu.dot_dimension_numbers<[1], [0], [0], [1], [0, 0, 1, 1], [], []>} : vector<8x32xf32>, vector<32x32xf32>, vector<8x32xf32> -> vector<8x32xf32>
    %c0_11 = arith.constant 0 : index
    %c0_12 = arith.constant 0 : index
    %11 = vector.load %arg4[%c0_11, %c0_12] : memref<32x16xf32, #tpu.memory_space<vmem>>, vector<32x16xf32>
    %cst_13 = arith.constant dense<0.000000e+00> : vector<8x16xf32>
    %12 = tpu.matmul %8, %11, %cst_13 {dimension_numbers = #tpu.dot_dimension_numbers<[1], [0], [0], [1], [0, 0, 1, 1], [], []>} : vector<8x32xf32>, vector<32x16xf32>, vector<8x16xf32> -> vector<8x16xf32>
    %13 = arith.mulf %10, %10 : vector<8x32xf32>
    %14 = arith.addf %7, %13 : vector<8x32xf32>
    %15 = vector.extract_strided_slice %1 {offsets = [0, 64], sizes = [8, 32], strides = [1, 1]} : vector<8x96xf32> to vector<8x32xf32>
    %c0_14 = arith.constant 0 : index
    %c0_15 = arith.constant 0 : index
    %16 = vector.load %arg3[%c0_14, %c0_15] : memref<32x32xf32, #tpu.memory_space<vmem>>, vector<32x32xf32>
    %cst_16 = arith.constant dense<0.000000e+00> : vector<8x32xf32>
    %17 = tpu.matmul %15, %16, %cst_16 {dimension_numbers = #tpu.dot_dimension_numbers<[1], [0], [0], [1], [0, 0, 1, 1], [], []>} : vector<8x32xf32>, vector<32x32xf32>, vector<8x32xf32> -> vector<8x32xf32>
    %c0_17 = arith.constant 0 : index
    %c0_18 = arith.constant 0 : index
    %18 = vector.load %arg4[%c0_17, %c0_18] : memref<32x16xf32, #tpu.memory_space<vmem>>, vector<32x16xf32>
    %cst_19 = arith.constant dense<0.000000e+00> : vector<8x16xf32>
    %19 = tpu.matmul %15, %18, %cst_19 {dimension_numbers = #tpu.dot_dimension_numbers<[1], [0], [0], [1], [0, 0, 1, 1], [], []>} : vector<8x32xf32>, vector<32x16xf32>, vector<8x16xf32> -> vector<8x16xf32>
    %20 = arith.mulf %17, %17 : vector<8x32xf32>
    %21 = arith.addf %14, %20 : vector<8x32xf32>
    %22 = math.sqrt %21 : vector<8x32xf32>
    %c0_20 = arith.constant 0 : index
    %c0_21 = arith.constant 0 : index
    %23 = vector.load %arg5[%c0_20, %c0_21] : memref<32x32xf32, #tpu.memory_space<vmem>>, vector<32x32xf32>
    %cst_22 = arith.constant dense<0.000000e+00> : vector<8x32xf32>
    %24 = tpu.matmul %0, %23, %cst_22 {dimension_numbers = #tpu.dot_dimension_numbers<[1], [0], [0], [1], [0, 0, 1, 1], [], []>} : vector<8x32xf32>, vector<32x32xf32>, vector<8x32xf32> -> vector<8x32xf32>
    %c0_23 = arith.constant 0 : index
    %c0_24 = arith.constant 0 : index
    %25 = vector.load %arg6[%c0_23, %c0_24] : memref<32x32xf32, #tpu.memory_space<vmem>>, vector<32x32xf32>
    %cst_25 = arith.constant dense<0.000000e+00> : vector<8x32xf32>
    %26 = tpu.matmul %22, %25, %cst_25 {dimension_numbers = #tpu.dot_dimension_numbers<[1], [0], [0], [1], [0, 0, 1, 1], [], []>} : vector<8x32xf32>, vector<32x32xf32>, vector<8x32xf32> -> vector<8x32xf32>
    %27 = arith.addf %24, %26 : vector<8x32xf32>
    %c0_26 = arith.constant 0 : index
    %c0_27 = arith.constant 0 : index
    %28 = vector.load %arg7[%c0_26, %c0_27] : memref<1x32xf32, #tpu.memory_space<vmem>>, vector<1x32xf32>
    %29 = vector.broadcast %28 : vector<1x32xf32> to vector<8x32xf32>
    %30 = arith.addf %27, %29 : vector<8x32xf32>
    %31 = arith.negf %30 : vector<8x32xf32>
    %32 = math.exp %31 : vector<8x32xf32>
    %cst_28 = arith.constant 1.000000e+00 : f32
    %33 = vector.broadcast %cst_28 : f32 to vector<8x32xf32>
    %34 = arith.addf %33, %32 : vector<8x32xf32>
    %35 = arith.divf %33, %34 : vector<8x32xf32>
    %36 = arith.mulf %30, %35 : vector<8x32xf32>
    %c0_29 = arith.constant 0 : index
    %c0_30 = arith.constant 0 : index
    %37 = vector.load %arg8[%c0_29, %c0_30] : memref<32x16xf32, #tpu.memory_space<vmem>>, vector<32x16xf32>
    %cst_31 = arith.constant dense<0.000000e+00> : vector<8x16xf32>
    %38 = tpu.matmul %36, %37, %cst_31 {dimension_numbers = #tpu.dot_dimension_numbers<[1], [0], [0], [1], [0, 0, 1, 1], [], []>} : vector<8x32xf32>, vector<32x16xf32>, vector<8x16xf32> -> vector<8x16xf32>
    %c0_32 = arith.constant 0 : index
    %c0_33 = arith.constant 0 : index
    %39 = vector.load %arg10[%c0_32, %c0_33] : memref<1x16xf32, #tpu.memory_space<vmem>>, vector<1x16xf32>
    %40 = vector.broadcast %39 : vector<1x16xf32> to vector<8x16xf32>
    %41 = arith.addf %38, %40 : vector<8x16xf32>
    %c0_34 = arith.constant 0 : index
    %c0_35 = arith.constant 0 : index
    %42 = vector.load %arg9[%c0_34, %c0_35] : memref<32x16xf32, #tpu.memory_space<vmem>>, vector<32x16xf32>
    %cst_36 = arith.constant dense<0.000000e+00> : vector<8x16xf32>
    %43 = tpu.matmul %36, %42, %cst_36 {dimension_numbers = #tpu.dot_dimension_numbers<[1], [0], [0], [1], [0, 0, 1, 1], [], []>} : vector<8x32xf32>, vector<32x16xf32>, vector<8x16xf32> -> vector<8x16xf32>
    %c0_37 = arith.constant 0 : index
    %c0_38 = arith.constant 0 : index
    %44 = vector.load %arg11[%c0_37, %c0_38] : memref<1x16xf32, #tpu.memory_space<vmem>>, vector<1x16xf32>
    %45 = vector.broadcast %44 : vector<1x16xf32> to vector<8x16xf32>
    %46 = arith.addf %43, %45 : vector<8x16xf32>
    %47 = arith.mulf %46, %6 : vector<8x16xf32>
    %48 = arith.mulf %46, %12 : vector<8x16xf32>
    %49 = arith.mulf %46, %19 : vector<8x16xf32>
    %50 = tpu.concatenate %41, %47, %48, %49 in 1 : vector<8x16xf32>, vector<8x16xf32>, vector<8x16xf32>, vector<8x16xf32> -> vector<8x64xf32>
    %c0_39 = arith.constant 0 : index
    %c0_40 = arith.constant 0 : index
    %51 = vector.load %arg12[%c0_39, %c0_40] : memref<8x64xf32, #tpu.memory_space<vmem>>, vector<8x64xf32>
    tpu.vector_store %arg12[%c0_39, %c0_40], %50 {strides = array<i32>} : memref<8x64xf32, #tpu.memory_space<vmem>>, vector<8x64xf32>,
    return
  }
  func.func @transform_0(%arg0: i32) -> (i32, i32) {
    %c0_i32 = arith.constant 0 : i32
    %c0_i32_0 = arith.constant 0 : i32
    return %arg0, %c0_i32 : i32, i32
  }
  func.func @transform_1(%arg0: i32) -> (i32, i32) {
    %c0_i32 = arith.constant 0 : i32
    %c0_i32_0 = arith.constant 0 : i32
    return %arg0, %c0_i32 : i32, i32
  }
  func.func @transform_2(%arg0: i32) -> (i32, i32) {
    %c0_i32 = arith.constant 0 : i32
    %c0_i32_0 = arith.constant 0 : i32
    %c0_i32_1 = arith.constant 0 : i32
    return %c0_i32, %c0_i32_0 : i32, i32
  }
  func.func @transform_3(%arg0: i32) -> (i32, i32) {
    %c0_i32 = arith.constant 0 : i32
    %c0_i32_0 = arith.constant 0 : i32
    %c0_i32_1 = arith.constant 0 : i32
    return %c0_i32, %c0_i32_0 : i32, i32
  }
  func.func @transform_4(%arg0: i32) -> (i32, i32) {
    %c0_i32 = arith.constant 0 : i32
    %c0_i32_0 = arith.constant 0 : i32
    %c0_i32_1 = arith.constant 0 : i32
    return %c0_i32, %c0_i32_0 : i32, i32
  }
  func.func @transform_5(%arg0: i32) -> (i32, i32) {
    %c0_i32 = arith.constant 0 : i32
    %c0_i32_0 = arith.constant 0 : i32
    %c0_i32_1 = arith.constant 0 : i32
    return %c0_i32, %c0_i32_0 : i32, i32
  }
  func.func @transform_6(%arg0: i32) -> (i32, i32) {
    %c0_i32 = arith.constant 0 : i32
    %c0_i32_0 = arith.constant 0 : i32
    %c0_i32_1 = arith.constant 0 : i32
    return %c0_i32, %c0_i32_0 : i32, i32
  }
  func.func @transform_7(%arg0: i32) -> (i32, i32) {
    %c0_i32 = arith.constant 0 : i32
    %c0_i32_0 = arith.constant 0 : i32
    %c0_i32_1 = arith.constant 0 : i32
    return %c0_i32, %c0_i32_0 : i32, i32
  }
  func.func @transform_8(%arg0: i32) -> (i32, i32) {
    %c0_i32 = arith.constant 0 : i32
    %c0_i32_0 = arith.constant 0 : i32
    %c0_i32_1 = arith.constant 0 : i32
    return %c0_i32, %c0_i32_0 : i32, i32
  }
  func.func @transform_9(%arg0: i32) -> (i32, i32) {
    %c0_i32 = arith.constant 0 : i32
    %c0_i32_0 = arith.constant 0 : i32
    %c0_i32_1 = arith.constant 0 : i32
    return %c0_i32, %c0_i32_0 : i32, i32
  }
  func.func @transform_10(%arg0: i32) -> (i32, i32) {
    %c0_i32 = arith.constant 0 : i32
    %c0_i32_0 = arith.constant 0 : i32
    %c0_i32_1 = arith.constant 0 : i32
    return %c0_i32, %c0_i32_0 : i32, i32
  }
  func.func @transform_11(%arg0: i32) -> (i32, i32) {
    %c0_i32 = arith.constant 0 : i32
    %c0_i32_0 = arith.constant 0 : i32
    return %arg0, %c0_i32 : i32, i32
  }
}

</mosaic_0001>

<llo_original>
// kernel: tpu_custom_call.1
$region0: #{tpu_custom_call.1}
  #allocation0 [shape = 'u32[]', space=smem, size = 0x4, offset = 0x4, fixed_abs, tag = 'smem constant byte address 0x4 - core index']
  #allocation1 [shape = 'u32[144,128]{1,0:T(1,128)}', space=vmem, size = 0x12000, scoped, tag = 'internal scratch']
  %s0 = inlined_call_operand.vmem [shape: f32[16,32], index: 0, kind: input, shape index: {}]
  %s1 = inlined_call_operand.hbm [shape: f32[16,96], index: 1, kind: input, shape index: {}]
  %s2 = inlined_call_operand.vmem [shape: f32[32,32], index: 2, kind: input, shape index: {}]
  %s3 = inlined_call_operand.vmem [shape: f32[32,16], index: 3, kind: input, shape index: {}]
  %s4 = inlined_call_operand.vmem [shape: f32[32,32], index: 4, kind: input, shape index: {}]
  %s5 = inlined_call_operand.vmem [shape: f32[32,32], index: 5, kind: input, shape index: {}]
  %s6 = inlined_call_operand.vmem [shape: f32[1,32], index: 6, kind: input, shape index: {}]
  %s7 = inlined_call_operand.vmem [shape: f32[32,16], index: 7, kind: input, shape index: {}]
  %s8 = inlined_call_operand.vmem [shape: f32[32,16], index: 8, kind: input, shape index: {}]
  %s9 = inlined_call_operand.vmem [shape: f32[1,16], index: 9, kind: input, shape index: {}]
  %s10 = inlined_call_operand.vmem [shape: f32[1,16], index: 10, kind: input, shape index: {}]
  %s11 = inlined_call_operand.hbm [shape: f32[16,64], index: 11, kind: output, shape index: {}]
  %s12 = sld [smem:[#allocation0]]
  $region81: #{tpu_custom_call.1} parent=0
    _
  %s14 = ssub.s32 1, %s12
  %s15 = scalar_select 0, %s14, %s12
  $region1: #{tpu_custom_call.1} parent=0
    #allocation2 [shape = 'u8[8192]{0}', space=vmem, size = 0x2000, scoped, tag = 'input window, operand 1']
    #allocation3 [shape = 's32[2]{0}', space=sflag, size = 0x8, scoped, tag = 'scoped memory for tpu_custom_call.1']
    #allocation4 [shape = 's32[2]{0}', space=sflag, size = 0x8, scoped, tag = 'scoped memory for tpu_custom_call.1']
    #allocation5 [shape = 'u8[8192]{0}', space=vmem, size = 0x2000, scoped, tag = 'output window, operand 0']
    %16 = vsyncpa [#allocation3], 0
    %s17 = scalar_lea.sflag [#allocation3], 1
    %18 = vsyncpa %s17, 0
    %19 = vsyncpa [#allocation4], 0
    %s20 = scalar_lea.sflag [#allocation4], 1
    %21 = vsyncpa %s20, 0
    loop: start=0, step=1, limit=4
    $region2: #{tpu_custom_call.1} parent=1 // loop_pre_header
      _
    $region3: #{tpu_custom_call.1} parent=1 // loop_header
      %s23 = sphi 0, %s27
      %p24 = scmp.ge.s32.totalorder %s23, 4
      %s33 = sphi 0, %s35
      %s36 = sphi 0, %s33
      %s37 = sphi 0, %s36
      %s53 = sphi 0, %s37
      %s59 = sphi 0, %s61
      %s62 = sphi 0, %s59
      %s63 = sphi 0, %s62
      %s79 = sphi 0, %s63
      %s83 = sphi 0, %s83
      %s85 = sphi 0, %s83
      %s86 = sphi 0, %s85
      %s100 = sphi 0, %s86
      %s104 = sphi 0, %s104
      %s106 = sphi 0, %s104
      %s107 = sphi 0, %s106
      %s121 = sphi 0, %s107
      %s125 = sphi 0, %s125
      %s127 = sphi 0, %s125
      %s128 = sphi 0, %s127
      %s142 = sphi 0, %s128
      %s146 = sphi 0, %s146
      %s148 = sphi 0, %s146
      %s149 = sphi 0, %s148
      %s163 = sphi 0, %s149
      %s167 = sphi 0, %s167
      %s169 = sphi 0, %s167
      %s170 = sphi 0, %s169
      %s184 = sphi 0, %s170
      %s188 = sphi 0, %s188
      %s190 = sphi 0, %s188
      %s191 = sphi 0, %s190
      %s205 = sphi 0, %s191
      %s209 = sphi 0, %s209
      %s211 = sphi 0, %s209
      %s212 = sphi 0, %s211
      %s226 = sphi 0, %s212
      %s230 = sphi 0, %s230
      %s232 = sphi 0, %s230
      %s233 = sphi 0, %s232
      %s247 = sphi 0, %s233
      %s251 = sphi 0, %s251
      %s253 = sphi 0, %s251
      %s254 = sphi 0, %s253
      %s268 = sphi 0, %s254
      %s274 = sphi 0, %s276
      %s277 = sphi 0, %s274
      %s278 = sphi 0, %s277
      %s294 = sphi 0, %s278
    $region4: #{tpu_custom_call.1} parent=1 // loop_header_branch
      %26 = sbr.rel (%p24) target = $region8
    $region5: #{tpu_custom_call.1} parent=1 // loop_body
      %s28 = ssub.s32 %s23, 1
      %s29 = ssub.s32 %s23, 2
      %s30 = sadd.s32 %s23, 1
      %s31 = ssub.s32 %s23, %s30
      %p32 = scmp.eq.s32.totalorder %s31, 0
      %s34 = sadd.s32 %s33, 1
      %s35 = scalar_select %p32, %s33, %s34
      %p38 = pneg %p32
      %p39 = scmp.eq.s32.totalorder %s23, 1
      %p40 = por %p38, %p39
      %p41 = scmp.ne.s32.totalorder %s33, %s36
      %p42 = scmp.eq.s32.totalorder %s23, 0
      %p43 = por %p41, %p42
      %p44 = scmp.ne.s32.totalorder %s33, %s36
      %p45 = scmp.eq.s32.totalorder %s28, 1
      %p46 = por %p44, %p45
      %p47 = scmp.ne.s32.totalorder %s36, %s37
      %p48 = scmp.eq.s32.totalorder %s28, 0
      %p49 = por %p47, %p48
      %p50 = scmp.ne.s32.totalorder %s36, %s37
      %p51 = scmp.eq.s32.totalorder %s29, 1
      %p52 = por %p50, %p51
      %p54 = scmp.ne.s32.totalorder %s37, %s53
      %p55 = scmp.eq.s32.totalorder %s29, 0
      %p56 = por %p54, %p55
      %s57 = ssub.s32 %s23, %s30
      %p58 = scmp.eq.s32.totalorder %s57, 0
      %s60 = sadd.s32 %s59, 1
      %s61 = scalar_select %p58, %s59, %s60
      %p64 = pneg %p58
      %p65 = scmp.eq.s32.totalorder %s23, 1
      %p66 = por %p64, %p65
      %p67 = scmp.ne.s32.totalorder %s59, %s62
      %p68 = scmp.eq.s32.totalorder %s23, 0
      %p69 = por %p67, %p68
      %p70 = scmp.ne.s32.totalorder %s59, %s62
      %p71 = scmp.eq.s32.totalorder %s28, 1
      %p72 = por %p70, %p71
      %p73 = scmp.ne.s32.totalorder %s62, %s63
      %p74 = scmp.eq.s32.totalorder %s28, 0
      %p75 = por %p73, %p74
      %p76 = scmp.ne.s32.totalorder %s62, %s63
      %p77 = scmp.eq.s32.totalorder %s29, 1
      %p78 = por %p76, %p77
      %p80 = scmp.ne.s32.totalorder %s63, %s79
      %p81 = scmp.eq.s32.totalorder %s29, 0
      %p82 = por %p80, %p81
      %s84 = sadd.s32 %s83, 1
      %p87 = scmp.eq.s32.totalorder %s23, 1
      %p88 = scmp.ne.s32.totalorder %s83, %s85
      %p89 = scmp.eq.s32.totalorder %s23, 0
      %p90 = por %p88, %p89
      %p91 = scmp.ne.s32.totalorder %s83, %s85
      %p92 = scmp.eq.s32.totalorder %s28, 1
      %p93 = por %p91, %p92
      %p94 = scmp.ne.s32.totalorder %s85, %s86
      %p95 = scmp.eq.s32.totalorder %s28, 0
      %p96 = por %p94, %p95
      %p97 = scmp.ne.s32.totalorder %s85, %s86
      %p98 = scmp.eq.s32.totalorder %s29, 1
      %p99 = por %p97, %p98
      %p101 = scmp.ne.s32.totalorder %s86, %s100
      %p102 = scmp.eq.s32.totalorder %s29, 0
      %p103 = por %p101, %p102
      %s105 = sadd.s32 %s104, 1
      %p108 = scmp.eq.s32.totalorder %s23, 1
      %p109 = scmp.ne.s32.totalorder %s104, %s106
      %p110 = scmp.eq.s32.totalorder %s23, 0
      %p111 = por %p109, %p110
      %p112 = scmp.ne.s32.totalorder %s104, %s106
      %p113 = scmp.eq.s32.totalorder %s28, 1
      %p114 = por %p112, %p113
      %p115 = scmp.ne.s32.totalorder %s106, %s107
      %p116 = scmp.eq.s32.totalorder %s28, 0
      %p117 = por %p115, %p116
      %p118 = scmp.ne.s32.totalorder %s106, %s107
      %p119 = scmp.eq.s32.totalorder %s29, 1
      %p120 = por %p118, %p119
      %p122 = scmp.ne.s32.totalorder %s107, %s121
      %p123 = scmp.eq.s32.totalorder %s29, 0
      %p124 = por %p122, %p123
      %s126 = sadd.s32 %s125, 1
      %p129 = scmp.eq.s32.totalorder %s23, 1
      %p130 = scmp.ne.s32.totalorder %s125, %s127
      %p131 = scmp.eq.s32.totalorder %s23, 0
      %p132 = por %p130, %p131
      %p133 = scmp.ne.s32.totalorder %s125, %s127
      %p134 = scmp.eq.s32.totalorder %s28, 1
      %p135 = por %p133, %p134
      %p136 = scmp.ne.s32.totalorder %s127, %s128
      %p137 = scmp.eq.s32.totalorder %s28, 0
      %p138 = por %p136, %p137
      %p139 = scmp.ne.s32.totalorder %s127, %s128
      %p140 = scmp.eq.s32.totalorder %s29, 1
      %p141 = por %p139, %p140
      %p143 = scmp.ne.s32.totalorder %s128, %s142
      %p144 = scmp.eq.s32.totalorder %s29, 0
      %p145 = por %p143, %p144
      %s147 = sadd.s32 %s146, 1
      %p150 = scmp.eq.s32.totalorder %s23, 1
      %p151 = scmp.ne.s32.totalorder %s146, %s148
      %p152 = scmp.eq.s32.totalorder %s23, 0
      %p153 = por %p151, %p152
      %p154 = scmp.ne.s32.totalorder %s146, %s148
      %p155 = scmp.eq.s32.totalorder %s28, 1
      %p156 = por %p154, %p155
      %p157 = scmp.ne.s32.totalorder %s148, %s149
      %p158 = scmp.eq.s32.totalorder %s28, 0
      %p159 = por %p157, %p158
      %p160 = scmp.ne.s32.totalorder %s148, %s149
      %p161 = scmp.eq.s32.totalorder %s29, 1
      %p162 = por %p160, %p161
      %p164 = scmp.ne.s32.totalorder %s149, %s163
      %p165 = scmp.eq.s32.totalorder %s29, 0
      %p166 = por %p164, %p165
      %s168 = sadd.s32 %s167, 1
      %p171 = scmp.eq.s32.totalorder %s23, 1
      %p172 = scmp.ne.s32.totalorder %s167, %s169
      %p173 = scmp.eq.s32.totalorder %s23, 0
      %p174 = por %p172, %p173
      %p175 = scmp.ne.s32.totalorder %s167, %s169
      %p176 = scmp.eq.s32.totalorder %s28, 1
      %p177 = por %p175, %p176
      %p178 = scmp.ne.s32.totalorder %s169, %s170
      %p179 = scmp.eq.s32.totalorder %s28, 0
      %p180 = por %p178, %p179
      %p181 = scmp.ne.s32.totalorder %s169, %s170
      %p182 = scmp.eq.s32.totalorder %s29, 1
      %p183 = por %p181, %p182
      %p185 = scmp.ne.s32.totalorder %s170, %s184
      %p186 = scmp.eq.s32.totalorder %s29, 0
      %p187 = por %p185, %p186
      %s189 = sadd.s32 %s188, 1
      %p192 = scmp.eq.s32.totalorder %s23, 1
      %p193 = scmp.ne.s32.totalorder %s188, %s190
      %p194 = scmp.eq.s32.totalorder %s23, 0
      %p195 = por %p193, %p194
      %p196 = scmp.ne.s32.totalorder %s188, %s190
      %p197 = scmp.eq.s32.totalorder %s28, 1
      %p198 = por %p196, %p197
      %p199 = scmp.ne.s32.totalorder %s190, %s191
      %p200 = scmp.eq.s32.totalorder %s28, 0
      %p201 = por %p199, %p200
      %p202 = scmp.ne.s32.totalorder %s190, %s191
      %p203 = scmp.eq.s32.totalorder %s29, 1
      %p204 = por %p202, %p203
      %p206 = scmp.ne.s32.totalorder %s191, %s205
      %p207 = scmp.eq.s32.totalorder %s29, 0
      %p208 = por %p206, %p207
      %s210 = sadd.s32 %s209, 1
      %p213 = scmp.eq.s32.totalorder %s23, 1
      %p214 = scmp.ne.s32.totalorder %s209, %s211
      %p215 = scmp.eq.s32.totalorder %s23, 0
      %p216 = por %p214, %p215
      %p217 = scmp.ne.s32.totalorder %s209, %s211
      %p218 = scmp.eq.s32.totalorder %s28, 1
      %p219 = por %p217, %p218
      %p220 = scmp.ne.s32.totalorder %s211, %s212
      %p221 = scmp.eq.s32.totalorder %s28, 0
      %p222 = por %p220, %p221
      %p223 = scmp.ne.s32.totalorder %s211, %s212
      %p224 = scmp.eq.s32.totalorder %s29, 1
      %p225 = por %p223, %p224
      %p227 = scmp.ne.s32.totalorder %s212, %s226
      %p228 = scmp.eq.s32.totalorder %s29, 0
      %p229 = por %p227, %p228
      %s231 = sadd.s32 %s230, 1
      %p234 = scmp.eq.s32.totalorder %s23, 1
      %p235 = scmp.ne.s32.totalorder %s230, %s232
      %p236 = scmp.eq.s32.totalorder %s23, 0
      %p237 = por %p235, %p236
      %p238 = scmp.ne.s32.totalorder %s230, %s232
      %p239 = scmp.eq.s32.totalorder %s28, 1
      %p240 = por %p238, %p239
      %p241 = scmp.ne.s32.totalorder %s232, %s233
      %p242 = scmp.eq.s32.totalorder %s28, 0
      %p243 = por %p241, %p242
      %p244 = scmp.ne.s32.totalorder %s232, %s233
      %p245 = scmp.eq.s32.totalorder %s29, 1
      %p246 = por %p244, %p245
      %p248 = scmp.ne.s32.totalorder %s233, %s247
      %p249 = scmp.eq.s32.totalorder %s29, 0
      %p250 = por %p248, %p249
      %s252 = sadd.s32 %s251, 1
      %p255 = scmp.eq.s32.totalorder %s23, 1
      %p256 = scmp.ne.s32.totalorder %s251, %s253
      %p257 = scmp.eq.s32.totalorder %s23, 0
      %p258 = por %p256, %p257
      %p259 = scmp.ne.s32.totalorder %s251, %s253
      %p260 = scmp.eq.s32.totalorder %s28, 1
      %p261 = por %p259, %p260
      %p262 = scmp.ne.s32.totalorder %s253, %s254
      %p263 = scmp.eq.s32.totalorder %s28, 0
      %p264 = por %p262, %p263
      %p265 = scmp.ne.s32.totalorder %s253, %s254
      %p266 = scmp.eq.s32.totalorder %s29, 1
      %p267 = por %p265, %p266
      %p269 = scmp.ne.s32.totalorder %s254, %s268
      %p270 = scmp.eq.s32.totalorder %s29, 0
      %p271 = por %p269, %p270
      %s272 = ssub.s32 %s23, %s30
      %p273 = scmp.eq.s32.totalorder %s272, 0
      %s275 = sadd.s32 %s274, 1
      %s276 = scalar_select %p273, %s274, %s275
      %p279 = pneg %p273
      %p280 = scmp.eq.s32.totalorder %s23, 1
      %p281 = por %p279, %p280
      %p282 = scmp.ne.s32.totalorder %s274, %s277
      %p283 = scmp.eq.s32.totalorder %s23, 0
      %p284 = por %p282, %p283
      %p285 = scmp.ne.s32.totalorder %s274, %s277
      %p286 = scmp.eq.s32.totalorder %s28, 1
      %p287 = por %p285, %p286
      %p288 = scmp.ne.s32.totalorder %s277, %s278
      %p289 = scmp.eq.s32.totalorder %s28, 0
      %p290 = por %p288, %p289
      %p291 = scmp.ne.s32.totalorder %s277, %s278
      %p292 = scmp.eq.s32.totalorder %s29, 1
      %p293 = por %p291, %p292
      %p295 = scmp.ne.s32.totalorder %s278, %s294
      %p296 = scmp.eq.s32.totalorder %s29, 0
      %p297 = por %p295, %p296
      %p298 = scmp.le.s32.totalorder 1, %s23
      %p299 = scmp.lt.s32.totalorder %s23, 3
      %p300 = pnand %p298, %p299
      %p301 = pneg %p300
      // Predicated region
      $region9: #{tpu_custom_call.1} parent=5 // pred_check
        _
      $region10: #{tpu_custom_call.1} parent=5 // pred_check_branch
        %303 = sbr.rel (%p300) target = $region12
      $region11: #{tpu_custom_call.1} parent=5 // pred_region
        %s304 = ssub.s32 %s23, 1
        // Predicated region
        $region13: #{tpu_custom_call.1} parent=11 // pred_check
          %p305 = pneg %p96
        $region14: #{tpu_custom_call.1} parent=11 // pred_check_branch
          %307 = sbr.rel (%p305) target = $region16
        $region15: #{tpu_custom_call.1} parent=11 // pred_region
          _
        $region16: #{tpu_custom_call.1} parent=11 // pred_fallthru
          _
        // Predicated region
        $region17: #{tpu_custom_call.1} parent=11 // pred_check
          %p308 = pneg %p117
        $region18: #{tpu_custom_call.1} parent=11 // pred_check_branch
          %310 = sbr.rel (%p308) target = $region20
        $region19: #{tpu_custom_call.1} parent=11 // pred_region
          _
        $region20: #{tpu_custom_call.1} parent=11 // pred_fallthru
          _
        // Predicated region
        $region21: #{tpu_custom_call.1} parent=11 // pred_check
          %p311 = pneg %p138
        $region22: #{tpu_custom_call.1} parent=11 // pred_check_branch
          %313 = sbr.rel (%p311) target = $region24
        $region23: #{tpu_custom_call.1} parent=11 // pred_region
          _
        $region24: #{tpu_custom_call.1} parent=11 // pred_fallthru
          _
        // Predicated region
        $region25: #{tpu_custom_call.1} parent=11 // pred_check
          %p314 = pneg %p159
        $region26: #{tpu_custom_call.1} parent=11 // pred_check_branch
          %316 = sbr.rel (%p314) target = $region28
        $region27: #{tpu_custom_call.1} parent=11 // pred_region
          _
        $region28: #{tpu_custom_call.1} parent=11 // pred_fallthru
          _
        // Predicated region
        $region29: #{tpu_custom_call.1} parent=11 // pred_check
          %p317 = pneg %p180
        $region30: #{tpu_custom_call.1} parent=11 // pred_check_branch
          %319 = sbr.rel (%p317) target = $region32
        $region31: #{tpu_custom_call.1} parent=11 // pred_region
          _
        $region32: #{tpu_custom_call.1} parent=11 // pred_fallthru
          _
        // Predicated region
        $region33: #{tpu_custom_call.1} parent=11 // pred_check
          %p320 = pneg %p201
        $region34: #{tpu_custom_call.1} parent=11 // pred_check_branch
          %322 = sbr.rel (%p320) target = $region36
        $region35: #{tpu_custom_call.1} parent=11 // pred_region
          _
        $region36: #{tpu_custom_call.1} parent=11 // pred_fallthru
          _
        // Predicated region
        $region37: #{tpu_custom_call.1} parent=11 // pred_check
          %p323 = pneg %p222
        $region38: #{tpu_custom_call.1} parent=11 // pred_check_branch
          %325 = sbr.rel (%p323) target = $region40
        $region39: #{tpu_custom_call.1} parent=11 // pred_region
          _
        $region40: #{tpu_custom_call.1} parent=11 // pred_fallthru
          _
        // Predicated region
        $region41: #{tpu_custom_call.1} parent=11 // pred_check
          %p326 = pneg %p243
        $region42: #{tpu_custom_call.1} parent=11 // pred_check_branch
          %328 = sbr.rel (%p326) target = $region44
        $region43: #{tpu_custom_call.1} parent=11 // pred_region
          _
        $region44: #{tpu_custom_call.1} parent=11 // pred_fallthru
          _
        // Predicated region
        $region45: #{tpu_custom_call.1} parent=11 // pred_check
          %p329 = pneg %p264
        $region46: #{tpu_custom_call.1} parent=11 // pred_check_branch
          %331 = sbr.rel (%p329) target = $region48
        $region47: #{tpu_custom_call.1} parent=11 // pred_region
          _
        $region48: #{tpu_custom_call.1} parent=11 // pred_fallthru
          _
      $region12: #{tpu_custom_call.1} parent=5 // pred_fallthru
        _
      %p332 = scmp.lt.s32.totalorder %s23, 2
      // Predicated region
      $region49: #{tpu_custom_call.1} parent=5 // pred_check
        %p333 = pneg %p332
      $region50: #{tpu_custom_call.1} parent=5 // pred_check_branch
        %335 = sbr.rel (%p333) target = $region52
      $region51: #{tpu_custom_call.1} parent=5 // pred_region
        // Predicated region
        $region53: #{tpu_custom_call.1} parent=51 // pred_check
          %p336 = pneg %p43
        $region54: #{tpu_custom_call.1} parent=51 // pred_check_branch
          %338 = sbr.rel (%p336) target = $region56
        $region55: #{tpu_custom_call.1} parent=51 // pred_region
          %p339 = scmp.lt.s32.totalorder %s23, 1
          %s340 = scalar_select %p339, %s23, 1
          %s341 = smul.addr %s340, 8
          %s342 = scalar_lea.vmem %s0, %s341
        $region56: #{tpu_custom_call.1} parent=51 // pred_fallthru
          _
        // Predicated region
        $region57: #{tpu_custom_call.1} parent=51 // pred_check
          %p343 = pneg %p69
        $region58: #{tpu_custom_call.1} parent=51 // pred_check_branch
          %345 = sbr.rel (%p343) target = $region60
        $region59: #{tpu_custom_call.1} parent=51 // pred_region
          %s346 = sand.u32 %s59, 1
          %s347 = scalar_lea.sflag [#allocation3], %s346
          %s348 = sand.u32 %s59, 1
          %s349 = smul.addr %s348, 8
          %s350 = scalar_lea.vmem [#allocation2], %s349
          %s352 = ssub.s32 128, 128
          %353 = vsyncadd %s347, %s352
          %s354 = smul.addr %s23, 128
          %s355 = scalar_lea.hbm %s1, %s354
          %s357 = sshll.u32 %s350, 4
          %s358 = int_to_ptr.vmem [resolvable:$true] %s357
          %360 = dma.hbm_to_vmem [thread:$0]  %s355, 128, %s358, %s347
        $region60: #{tpu_custom_call.1} parent=51 // pred_fallthru
          _
      $region52: #{tpu_custom_call.1} parent=5 // pred_fallthru
        _
      %p361 = scmp.le.s32.totalorder 1, %s23
      %p362 = scmp.lt.s32.totalorder %s23, 3
      %p363 = pnand %p361, %p362
      %p364 = pneg %p363
      // Predicated region
      $region61: #{tpu_custom_call.1} parent=5 // pred_check
        _
      $region62: #{tpu_custom_call.1} parent=5 // pred_check_branch
        %366 = sbr.rel (%p363) target = $region64
      $region63: #{tpu_custom_call.1} parent=5 // pred_region
        %s367 = ssub.s32 %s23, 1
        %s368 = sand.u32 %s62, 1
        %s369 = scalar_lea.sflag [#allocation3], %s368
        %s370 = sand.u32 %s62, 1
        %s371 = smul.addr %s370, 8
        %s372 = scalar_lea.vmem [#allocation2], %s371
        // Predicated region
        $region65: #{tpu_custom_call.1} parent=63 // pred_check
          %p373 = pneg %p75
        $region66: #{tpu_custom_call.1} parent=63 // pred_check_branch
          %375 = sbr.rel (%p373) target = $region68
        $region67: #{tpu_custom_call.1} parent=63 // pred_region
          %376 = dma.done %s369, 128
        $region68: #{tpu_custom_call.1} parent=63 // pred_fallthru
          _
        %p377 = scmp.lt.s32.totalorder %s28, 1
        %s378 = scalar_select %p377, %s28, 1
        %s379 = smul.addr %s378, 8
        %s380 = scalar_lea.vmem %s0, %s379
        %p381 = pneg %p49
        %p382 = pneg %p46
        %s383 = sand.u32 %s62, 1
        %s384 = scalar_lea.sflag [#allocation3], %s383
        %s385 = sand.u32 %s62, 1
        %s386 = smul.addr %s385, 8
        %s387 = scalar_lea.vmem [#allocation2], %s386
        %p388 = pneg %p75
        %p389 = pneg %p72
        %p390 = pneg %p96
        %p391 = pneg %p93
        %p392 = pneg %p117
        %p393 = pneg %p114
        %p394 = pneg %p138
        %p395 = pneg %p135
        %p396 = pneg %p159
        %p397 = pneg %p156
        %p398 = pneg %p180
        %p399 = pneg %p177
        %p400 = pneg %p201
        %p401 = pneg %p198
        %p402 = pneg %p222
        %p403 = pneg %p219
        %p404 = pneg %p243
        %p405 = pneg %p240
        %p406 = pneg %p264
        %p407 = pneg %p261
        %p408 = pneg %p290
        %p409 = pneg %p287
        %s410 = sand.u32 %s277, 1
        %s411 = scalar_lea.sflag [#allocation4], %s410
        %s412 = sand.u32 %s277, 1
        %s413 = smul.addr %s412, 8
        %s414 = scalar_lea.vmem [#allocation5], %s413
        %p415 = scmp.lt.s32.totalorder %s28, 1
        %s416 = scalar_select %p415, %s28, 1
        %s417 = smul.addr %s416, 8
        %s418 = scalar_lea.vmem %s0, %s417
        %v419 = vld [vmem:[%s418] sm:$0xff]
        %v420 = vld [vmem:[%s372] sm:$0xff]
        %v421 = vld [vmem:[%s2] sm:$0xff]
        %v422 = vld [vmem:[%s2 + $0x8] sm:$0xff]
        %v423 = vld [vmem:[%s2 + $0x10] sm:$0xff]
        %v424 = vld [vmem:[%s2 + $0x18] sm:$0xff]
        %vm425 = vcmask 261120
        %v427 = vsel %vm425, %v420, 0
        %429 = vmatprep.subr.mxu0 0.0
        %430 = vmatpush1.msra.mxu0 0.0
        %431 = vmatprep.subr.mxu0 0.0
        %432 = vmatpush1.msra.mxu0 0.0
        %433 = vmatprep.subr.mxu0 0.0
        %434 = vmatpush1.msra.mxu0 0.0
        %435 = vmatprep.subr.mxu0 0.0
        %436 = vmatpush1.msra.mxu0 0.0
        %437 = vmatprep.subr.mxu0 0.0
        %438 = vmatpush1.msra.mxu0 0.0
        %439 = vmatprep.subr.mxu0 0.0
        %440 = vmatpush1.msra.mxu0 0.0
        %441 = vmatprep.subr.mxu0 0.0
        %442 = vmatpush1.msra.mxu0 0.0
        %443 = vmatprep.subr.mxu0 0.0
        %444 = vmatpush1.msra.mxu0 0.0
        %445 = vmatprep.subr.mxu0 0.0
        %446 = vmatpush1.msra.mxu0 0.0
        %447 = vmatprep.subr.mxu0 0.0
        %448 = vmatpush1.msra.mxu0 0.0
        %449 = vmatprep.subr.mxu0 0.0
        %450 = vmatpush1.msra.mxu0 0.0
        %451 = vmatprep.subr.mxu0 0.0
        %452 = vmatpush1.msra.mxu0 0.0
        %453 = vmatprep.subr.mxu0 0.0
        %454 = vmatpush1.msra.mxu0 %v424
        %455 = vmatprep.subr.mxu0 0.0
        %456 = vmatpush1.msra.mxu0 %v423
        %457 = vmatprep.subr.mxu0 0.0
        %458 = vmatpush1.msra.mxu0 %v422
        %459 = vmatprep.subr.mxu0 0.0
        %460 = vmatpush1.msra.mxu0 %v421
        %461 = vmatprep.subr.mxu0 0.0
        %462 = vmatpush2.msra.mxu0 0.0
        %463 = vmatprep.subr.mxu0 0.0
        %464 = vmatpush2.msra.mxu0 0.0
        %465 = vmatprep.subr.mxu0 0.0
        %466 = vmatpush2.msra.mxu0 0.0
        %467 = vmatprep.subr.mxu0 0.0
        %468 = vmatpush2.msra.mxu0 0.0
        %469 = vmatprep.subr.mxu0 0.0
        %470 = vmatpush2.msra.mxu0 0.0
        %471 = vmatprep.subr.mxu0 0.0
        %472 = vmatpush2.msra.mxu0 0.0
        %473 = vmatprep.subr.mxu0 0.0
        %474 = vmatpush2.msra.mxu0 0.0
        %475 = vmatprep.subr.mxu0 0.0
        %476 = vmatpush2.msra.mxu0 0.0
        %477 = vmatprep.subr.mxu0 0.0
        %478 = vmatpush2.msra.mxu0 0.0
        %479 = vmatprep.subr.mxu0 0.0
        %480 = vmatpush2.msra.mxu0 0.0
        %481 = vmatprep.subr.mxu0 0.0
        %482 = vmatpush2.msra.mxu0 0.0
        %483 = vmatprep.subr.mxu0 0.0
        %484 = vmatpush2.msra.mxu0 0.0
        %485 = vmatprep.subr.mxu0 0.0
        %486 = vmatpush2.msra.mxu0 0.0
        %487 = vmatprep.subr.mxu0 0.0
        %488 = vmatpush2.msra.mxu0 0.0
        %489 = vmatprep.subr.mxu0 0.0
        %490 = vmatpush2.msra.mxu0 0.0
        %491 = vmatprep.subr.mxu0 0.0
        %492 = vmatpush2.msra.mxu0 0.0
        %493 = vmatprep.mubr.f32.mxu0 0.0
        %494 = vmatmul.mubr.f32.gmra.mxu0 %v427
        %v495 = vpop.f32.mrf.mxu0
        %v496 = vadd.f32 0.0, %v495
        %v497 = vpop.f32.mrf.mxu0
        %498 = vdwg.mxu0
        %v499 = vld [vmem:[%s3] sm:$0xff]
        %v500 = vld [vmem:[%s3 + $0x8] sm:$0xff]
        %v501 = vld [vmem:[%s3 + $0x10] sm:$0xff]
        %v502 = vld [vmem:[%s3 + $0x18] sm:$0xff]
        %503 = vmatprep.subr.mxu0 0.0
        %504 = vmatpush1.msra.mxu0 0.0
        %505 = vmatprep.subr.mxu0 0.0
        %506 = vmatpush1.msra.mxu0 0.0
        %507 = vmatprep.subr.mxu0 0.0
        %508 = vmatpush1.msra.mxu0 0.0
        %509 = vmatprep.subr.mxu0 0.0
        %510 = vmatpush1.msra.mxu0 0.0
        %511 = vmatprep.subr.mxu0 0.0
        %512 = vmatpush1.msra.mxu0 0.0
        %513 = vmatprep.subr.mxu0 0.0
        %514 = vmatpush1.msra.mxu0 0.0
        %515 = vmatprep.subr.mxu0 0.0
        %516 = vmatpush1.msra.mxu0 0.0
        %517 = vmatprep.subr.mxu0 0.0
        %518 = vmatpush1.msra.mxu0 0.0
        %519 = vmatprep.subr.mxu0 0.0
        %520 = vmatpush1.msra.mxu0 0.0
        %521 = vmatprep.subr.mxu0 0.0
        %522 = vmatpush1.msra.mxu0 0.0
        %523 = vmatprep.subr.mxu0 0.0
        %524 = vmatpush1.msra.mxu0 0.0
        %525 = vmatprep.subr.mxu0 0.0
        %526 = vmatpush1.msra.mxu0 0.0
        %527 = vmatprep.subr.mxu0 0.0
        %528 = vmatpush1.msra.mxu0 %v502
        %529 = vmatprep.subr.mxu0 0.0
        %530 = vmatpush1.msra.mxu0 %v501
        %531 = vmatprep.subr.mxu0 0.0
        %532 = vmatpush1.msra.mxu0 %v500
        %533 = vmatprep.subr.mxu0 0.0
        %534 = vmatpush1.msra.mxu0 %v499
        %535 = vmatprep.subr.mxu0 0.0
        %536 = vmatpush2.msra.mxu0 0.0
        %537 = vmatprep.subr.mxu0 0.0
        %538 = vmatpush2.msra.mxu0 0.0
        %539 = vmatprep.subr.mxu0 0.0
        %540 = vmatpush2.msra.mxu0 0.0
        %541 = vmatprep.subr.mxu0 0.0
        %542 = vmatpush2.msra.mxu0 0.0
        %543 = vmatprep.subr.mxu0 0.0
        %544 = vmatpush2.msra.mxu0 0.0
        %545 = vmatprep.subr.mxu0 0.0
        %546 = vmatpush2.msra.mxu0 0.0
        %547 = vmatprep.subr.mxu0 0.0
        %548 = vmatpush2.msra.mxu0 0.0
        %549 = vmatprep.subr.mxu0 0.0
        %550 = vmatpush2.msra.mxu0 0.0
        %551 = vmatprep.subr.mxu0 0.0
        %552 = vmatpush2.msra.mxu0 0.0
        %553 = vmatprep.subr.mxu0 0.0
        %554 = vmatpush2.msra.mxu0 0.0
        %555 = vmatprep.subr.mxu0 0.0
        %556 = vmatpush2.msra.mxu0 0.0
        %557 = vmatprep.subr.mxu0 0.0
        %558 = vmatpush2.msra.mxu0 0.0
        %559 = vmatprep.subr.mxu0 0.0
        %560 = vmatpush2.msra.mxu0 0.0
        %561 = vmatprep.subr.mxu0 0.0
        %562 = vmatpush2.msra.mxu0 0.0
        %563 = vmatprep.subr.mxu0 0.0
        %564 = vmatpush2.msra.mxu0 0.0
        %565 = vmatprep.subr.mxu0 0.0
        %566 = vmatpush2.msra.mxu0 0.0
        %567 = vmatprep.mubr.f32.mxu0 0.0
        %568 = vmatmul.mubr.f32.gmra.mxu0 %v427
        %v569 = vpop.f32.mrf.mxu0
        %v570 = vadd.f32 0.0, %v569
        %v571 = vpop.f32.mrf.mxu0
        %572 = vdwg.mxu0
        %v573 = vmul.f32 %v496, %v496
        %574 = vrot.lane.b32.xlu0 %v420, 96
        %v575 = vpop.permute.xlu0 %574
        %v576 = vsel %vm425, %v575, 0
        %578 = vmatprep.subr.mxu0 0.0
        %579 = vmatpush1.msra.mxu0 0.0
        %580 = vmatprep.subr.mxu0 0.0
        %581 = vmatpush1.msra.mxu0 0.0
        %582 = vmatprep.subr.mxu0 0.0
        %583 = vmatpush1.msra.mxu0 0.0
        %584 = vmatprep.subr.mxu0 0.0
        %585 = vmatpush1.msra.mxu0 0.0
        %586 = vmatprep.subr.mxu0 0.0
        %587 = vmatpush1.msra.mxu0 0.0
        %588 = vmatprep.subr.mxu0 0.0
        %589 = vmatpush1.msra.mxu0 0.0
        %590 = vmatprep.subr.mxu0 0.0
        %591 = vmatpush1.msra.mxu0 0.0
        %592 = vmatprep.subr.mxu0 0.0
        %593 = vmatpush1.msra.mxu0 0.0
        %594 = vmatprep.subr.mxu0 0.0
        %595 = vmatpush1.msra.mxu0 0.0
        %596 = vmatprep.subr.mxu0 0.0
        %597 = vmatpush1.msra.mxu0 0.0
        %598 = vmatprep.subr.mxu0 0.0
        %599 = vmatpush1.msra.mxu0 0.0
        %600 = vmatprep.subr.mxu0 0.0
        %601 = vmatpush1.msra.mxu0 0.0
        %602 = vmatprep.subr.mxu0 0.0
        %603 = vmatpush1.msra.mxu0 %v424
        %604 = vmatprep.subr.mxu0 0.0
        %605 = vmatpush1.msra.mxu0 %v423
        %606 = vmatprep.subr.mxu0 0.0
        %607 = vmatpush1.msra.mxu0 %v422
        %608 = vmatprep.subr.mxu0 0.0
        %609 = vmatpush1.msra.mxu0 %v421
        %610 = vmatprep.subr.mxu0 0.0
        %611 = vmatpush2.msra.mxu0 0.0
        %612 = vmatprep.subr.mxu0 0.0
        %613 = vmatpush2.msra.mxu0 0.0
        %614 = vmatprep.subr.mxu0 0.0
        %615 = vmatpush2.msra.mxu0 0.0
        %616 = vmatprep.subr.mxu0 0.0
        %617 = vmatpush2.msra.mxu0 0.0
        %618 = vmatprep.subr.mxu0 0.0
        %619 = vmatpush2.msra.mxu0 0.0
        %620 = vmatprep.subr.mxu0 0.0
        %621 = vmatpush2.msra.mxu0 0.0
        %622 = vmatprep.subr.mxu0 0.0
        %623 = vmatpush2.msra.mxu0 0.0
        %624 = vmatprep.subr.mxu0 0.0
        %625 = vmatpush2.msra.mxu0 0.0
        %626 = vmatprep.subr.mxu0 0.0
        %627 = vmatpush2.msra.mxu0 0.0
        %628 = vmatprep.subr.mxu0 0.0
        %629 = vmatpush2.msra.mxu0 0.0
        %630 = vmatprep.subr.mxu0 0.0
        %631 = vmatpush2.msra.mxu0 0.0
        %632 = vmatprep.subr.mxu0 0.0
        %633 = vmatpush2.msra.mxu0 0.0
        %634 = vmatprep.subr.mxu0 0.0
        %635 = vmatpush2.msra.mxu0 0.0
        %636 = vmatprep.subr.mxu0 0.0
        %637 = vmatpush2.msra.mxu0 0.0
        %638 = vmatprep.subr.mxu0 0.0
        %639 = vmatpush2.msra.mxu0 0.0
        %640 = vmatprep.subr.mxu0 0.0
        %641 = vmatpush2.msra.mxu0 0.0
        %642 = vmatprep.mubr.f32.mxu0 0.0
        %643 = vmatmul.mubr.f32.gmra.mxu0 %v576
        %v644 = vpop.f32.mrf.mxu0
        %v645 = vadd.f32 0.0, %v644
        %v646 = vpop.f32.mrf.mxu0
        %647 = vdwg.mxu0
        %648 = vmatprep.subr.mxu0 0.0
        %649 = vmatpush1.msra.mxu0 0.0
        %650 = vmatprep.subr.mxu0 0.0
        %651 = vmatpush1.msra.mxu0 0.0
        %652 = vmatprep.subr.mxu0 0.0
        %653 = vmatpush1.msra.mxu0 0.0
        %654 = vmatprep.subr.mxu0 0.0
        %655 = vmatpush1.msra.mxu0 0.0
        %656 = vmatprep.subr.mxu0 0.0
        %657 = vmatpush1.msra.mxu0 0.0
        %658 = vmatprep.subr.mxu0 0.0
        %659 = vmatpush1.msra.mxu0 0.0
        %660 = vmatprep.subr.mxu0 0.0
        %661 = vmatpush1.msra.mxu0 0.0
        %662 = vmatprep.subr.mxu0 0.0
        %663 = vmatpush1.msra.mxu0 0.0
        %664 = vmatprep.subr.mxu0 0.0
        %665 = vmatpush1.msra.mxu0 0.0
        %666 = vmatprep.subr.mxu0 0.0
        %667 = vmatpush1.msra.mxu0 0.0
        %668 = vmatprep.subr.mxu0 0.0
        %669 = vmatpush1.msra.mxu0 0.0
        %670 = vmatprep.subr.mxu0 0.0
        %671 = vmatpush1.msra.mxu0 0.0
        %672 = vmatprep.subr.mxu0 0.0
        %673 = vmatpush1.msra.mxu0 %v502
        %674 = vmatprep.subr.mxu0 0.0
        %675 = vmatpush1.msra.mxu0 %v501
        %676 = vmatprep.subr.mxu0 0.0
        %677 = vmatpush1.msra.mxu0 %v500
        %678 = vmatprep.subr.mxu0 0.0
        %679 = vmatpush1.msra.mxu0 %v499
        %680 = vmatprep.subr.mxu0 0.0
        %681 = vmatpush2.msra.mxu0 0.0
        %682 = vmatprep.subr.mxu0 0.0
        %683 = vmatpush2.msra.mxu0 0.0
        %684 = vmatprep.subr.mxu0 0.0
        %685 = vmatpush2.msra.mxu0 0.0
        %686 = vmatprep.subr.mxu0 0.0
        %687 = vmatpush2.msra.mxu0 0.0
        %688 = vmatprep.subr.mxu0 0.0
        %689 = vmatpush2.msra.mxu0 0.0
        %690 = vmatprep.subr.mxu0 0.0
        %691 = vmatpush2.msra.mxu0 0.0
        %692 = vmatprep.subr.mxu0 0.0
        %693 = vmatpush2.msra.mxu0 0.0
        %694 = vmatprep.subr.mxu0 0.0
        %695 = vmatpush2.msra.mxu0 0.0
        %696 = vmatprep.subr.mxu0 0.0
        %697 = vmatpush2.msra.mxu0 0.0
        %698 = vmatprep.subr.mxu0 0.0
        %699 = vmatpush2.msra.mxu0 0.0
        %700 = vmatprep.subr.mxu0 0.0
        %701 = vmatpush2.msra.mxu0 0.0
        %702 = vmatprep.subr.mxu0 0.0
        %703 = vmatpush2.msra.mxu0 0.0
        %704 = vmatprep.subr.mxu0 0.0
        %705 = vmatpush2.msra.mxu0 0.0
        %706 = vmatprep.subr.mxu0 0.0
        %707 = vmatpush2.msra.mxu0 0.0
        %708 = vmatprep.subr.mxu0 0.0
        %709 = vmatpush2.msra.mxu0 0.0
        %710 = vmatprep.subr.mxu0 0.0
        %711 = vmatpush2.msra.mxu0 0.0
        %712 = vmatprep.mubr.f32.mxu0 0.0
        %713 = vmatmul.mubr.f32.gmra.mxu0 %v576
        %v714 = vpop.f32.mrf.mxu0
        %v715 = vadd.f32 0.0, %v714
        %v716 = vpop.f32.mrf.mxu0
        %717 = vdwg.mxu0
        %v718 = vmul.f32 %v645, %v645
        %v719 = vadd.f32 %v573, %v718
        %720 = vrot.lane.b32.xlu0 %v420, 64
        %v721 = vpop.permute.xlu0 %720
        %v722 = vsel %vm425, %v721, 0
        %724 = vmatprep.subr.mxu0 0.0
        %725 = vmatpush1.msra.mxu0 0.0
        %726 = vmatprep.subr.mxu0 0.0
        %727 = vmatpush1.msra.mxu0 0.0
        %728 = vmatprep.subr.mxu0 0.0
        %729 = vmatpush1.msra.mxu0 0.0
        %730 = vmatprep.subr.mxu0 0.0
        %731 = vmatpush1.msra.mxu0 0.0
        %732 = vmatprep.subr.mxu0 0.0
        %733 = vmatpush1.msra.mxu0 0.0
        %734 = vmatprep.subr.mxu0 0.0
        %735 = vmatpush1.msra.mxu0 0.0
        %736 = vmatprep.subr.mxu0 0.0
        %737 = vmatpush1.msra.mxu0 0.0
        %738 = vmatprep.subr.mxu0 0.0
        %739 = vmatpush1.msra.mxu0 0.0
        %740 = vmatprep.subr.mxu0 0.0
        %741 = vmatpush1.msra.mxu0 0.0
        %742 = vmatprep.subr.mxu0 0.0
        %743 = vmatpush1.msra.mxu0 0.0
        %744 = vmatprep.subr.mxu0 0.0
        %745 = vmatpush1.msra.mxu0 0.0
        %746 = vmatprep.subr.mxu0 0.0
        %747 = vmatpush1.msra.mxu0 0.0
        %748 = vmatprep.subr.mxu0 0.0
        %749 = vmatpush1.msra.mxu0 %v424
        %750 = vmatprep.subr.mxu0 0.0
        %751 = vmatpush1.msra.mxu0 %v423
        %752 = vmatprep.subr.mxu0 0.0
        %753 = vmatpush1.msra.mxu0 %v422
        %754 = vmatprep.subr.mxu0 0.0
        %755 = vmatpush1.msra.mxu0 %v421
        %756 = vmatprep.subr.mxu0 0.0
        %757 = vmatpush2.msra.mxu0 0.0
        %758 = vmatprep.subr.mxu0 0.0
        %759 = vmatpush2.msra.mxu0 0.0
        %760 = vmatprep.subr.mxu0 0.0
        %761 = vmatpush2.msra.mxu0 0.0
        %762 = vmatprep.subr.mxu0 0.0
        %763 = vmatpush2.msra.mxu0 0.0
        %764 = vmatprep.subr.mxu0 0.0
        %765 = vmatpush2.msra.mxu0 0.0
        %766 = vmatprep.subr.mxu0 0.0
        %767 = vmatpush2.msra.mxu0 0.0
        %768 = vmatprep.subr.mxu0 0.0
        %769 = vmatpush2.msra.mxu0 0.0
        %770 = vmatprep.subr.mxu0 0.0
        %771 = vmatpush2.msra.mxu0 0.0
        %772 = vmatprep.subr.mxu0 0.0
        %773 = vmatpush2.msra.mxu0 0.0
        %774 = vmatprep.subr.mxu0 0.0
        %775 = vmatpush2.msra.mxu0 0.0
        %776 = vmatprep.subr.mxu0 0.0
        %777 = vmatpush2.msra.mxu0 0.0
        %778 = vmatprep.subr.mxu0 0.0
        %779 = vmatpush2.msra.mxu0 0.0
        %780 = vmatprep.subr.mxu0 0.0
        %781 = vmatpush2.msra.mxu0 0.0
        %782 = vmatprep.subr.mxu0 0.0
        %783 = vmatpush2.msra.mxu0 0.0
        %784 = vmatprep.subr.mxu0 0.0
        %785 = vmatpush2.msra.mxu0 0.0
        %786 = vmatprep.subr.mxu0 0.0
        %787 = vmatpush2.msra.mxu0 0.0
        %788 = vmatprep.mubr.f32.mxu0 0.0
        %789 = vmatmul.mubr.f32.gmra.mxu0 %v722
        %v790 = vpop.f32.mrf.mxu0
        %v791 = vadd.f32 0.0, %v790
        %v792 = vpop.f32.mrf.mxu0
        %793 = vdwg.mxu0
        %794 = vmatprep.subr.mxu0 0.0
        %795 = vmatpush1.msra.mxu0 0.0
        %796 = vmatprep.subr.mxu0 0.0
        %797 = vmatpush1.msra.mxu0 0.0
        %798 = vmatprep.subr.mxu0 0.0
        %799 = vmatpush1.msra.mxu0 0.0
        %800 = vmatprep.subr.mxu0 0.0
        %801 = vmatpush1.msra.mxu0 0.0
        %802 = vmatprep.subr.mxu0 0.0
        %803 = vmatpush1.msra.mxu0 0.0
        %804 = vmatprep.subr.mxu0 0.0
        %805 = vmatpush1.msra.mxu0 0.0
        %806 = vmatprep.subr.mxu0 0.0
        %807 = vmatpush1.msra.mxu0 0.0
        %808 = vmatprep.subr.mxu0 0.0
        %809 = vmatpush1.msra.mxu0 0.0
        %810 = vmatprep.subr.mxu0 0.0
        %811 = vmatpush1.msra.mxu0 0.0
        %812 = vmatprep.subr.mxu0 0.0
        %813 = vmatpush1.msra.mxu0 0.0
        %814 = vmatprep.subr.mxu0 0.0
        %815 = vmatpush1.msra.mxu0 0.0
        %816 = vmatprep.subr.mxu0 0.0
        %817 = vmatpush1.msra.mxu0 0.0
        %818 = vmatprep.subr.mxu0 0.0
        %819 = vmatpush1.msra.mxu0 %v502
        %820 = vmatprep.subr.mxu0 0.0
        %821 = vmatpush1.msra.mxu0 %v501
        %822 = vmatprep.subr.mxu0 0.0
        %823 = vmatpush1.msra.mxu0 %v500
        %824 = vmatprep.subr.mxu0 0.0
        %825 = vmatpush1.msra.mxu0 %v499
        %826 = vmatprep.subr.mxu0 0.0
        %827 = vmatpush2.msra.mxu0 0.0
        %828 = vmatprep.subr.mxu0 0.0
        %829 = vmatpush2.msra.mxu0 0.0
        %830 = vmatprep.subr.mxu0 0.0
        %831 = vmatpush2.msra.mxu0 0.0
        %832 = vmatprep.subr.mxu0 0.0
        %833 = vmatpush2.msra.mxu0 0.0
        %834 = vmatprep.subr.mxu0 0.0
        %835 = vmatpush2.msra.mxu0 0.0
        %836 = vmatprep.subr.mxu0 0.0
        %837 = vmatpush2.msra.mxu0 0.0
        %838 = vmatprep.subr.mxu0 0.0
        %839 = vmatpush2.msra.mxu0 0.0
        %840 = vmatprep.subr.mxu0 0.0
        %841 = vmatpush2.msra.mxu0 0.0
        %842 = vmatprep.subr.mxu0 0.0
        %843 = vmatpush2.msra.mxu0 0.0
        %844 = vmatprep.subr.mxu0 0.0
        %845 = vmatpush2.msra.mxu0 0.0
        %846 = vmatprep.subr.mxu0 0.0
        %847 = vmatpush2.msra.mxu0 0.0
        %848 = vmatprep.subr.mxu0 0.0
        %849 = vmatpush2.msra.mxu0 0.0
        %850 = vmatprep.subr.mxu0 0.0
        %851 = vmatpush2.msra.mxu0 0.0
        %852 = vmatprep.subr.mxu0 0.0
        %853 = vmatpush2.msra.mxu0 0.0
        %854 = vmatprep.subr.mxu0 0.0
        %855 = vmatpush2.msra.mxu0 0.0
        %856 = vmatprep.subr.mxu0 0.0
        %857 = vmatpush2.msra.mxu0 0.0
        %858 = vmatprep.mubr.f32.mxu0 0.0
        %859 = vmatmul.mubr.f32.gmra.mxu0 %v722
        %v860 = vpop.f32.mrf.mxu0
        %v861 = vadd.f32 0.0, %v860
        %v862 = vpop.f32.mrf.mxu0
        %863 = vdwg.mxu0
        %v864 = vmul.f32 %v791, %v791
        %v865 = vadd.f32 %v719, %v864
        %v866 = vrsqrt.pop %v865
        %v867 = vmul.f32 %v865, %v866
        %vm868 = vcmp.eq.f32.partialorder %v865, inf
        %v869 = vsel %vm868, %v865, %v867
        %vm870 = vcmp.eq.f32.partialorder %v865, 0.0
        %v871 = vand.u32 %v865, 2147483648
        %v872 = vsel %vm870, %v871, %v869
        %v873 = vld [vmem:[%s4] sm:$0xff]
        %v874 = vld [vmem:[%s4 + $0x8] sm:$0xff]
        %v875 = vld [vmem:[%s4 + $0x10] sm:$0xff]
        %v876 = vld [vmem:[%s4 + $0x18] sm:$0xff]
        %v877 = vld [vmem:[%s5] sm:$0xff]
        %v878 = vld [vmem:[%s5 + $0x8] sm:$0xff]
        %v879 = vld [vmem:[%s5 + $0x10] sm:$0xff]
        %v880 = vld [vmem:[%s5 + $0x18] sm:$0xff]
        %v882 = vsel %vm425, %v872, 0
        %884 = vmatprep.subr.mxu0 0.0
        %885 = vmatpush1.msra.mxu0 0.0
        %886 = vmatprep.subr.mxu0 0.0
        %887 = vmatpush1.msra.mxu0 0.0
        %888 = vmatprep.subr.mxu0 0.0
        %889 = vmatpush1.msra.mxu0 0.0
        %890 = vmatprep.subr.mxu0 0.0
        %891 = vmatpush1.msra.mxu0 0.0
        %892 = vmatprep.subr.mxu0 0.0
        %893 = vmatpush1.msra.mxu0 0.0
        %894 = vmatprep.subr.mxu0 0.0
        %895 = vmatpush1.msra.mxu0 0.0
        %896 = vmatprep.subr.mxu0 0.0
        %897 = vmatpush1.msra.mxu0 0.0
        %898 = vmatprep.subr.mxu0 0.0
        %899 = vmatpush1.msra.mxu0 0.0
        %900 = vmatprep.subr.mxu0 0.0
        %901 = vmatpush1.msra.mxu0 0.0
        %902 = vmatprep.subr.mxu0 0.0
        %903 = vmatpush1.msra.mxu0 0.0
        %904 = vmatprep.subr.mxu0 0.0
        %905 = vmatpush1.msra.mxu0 0.0
        %906 = vmatprep.subr.mxu0 0.0
        %907 = vmatpush1.msra.mxu0 0.0
        %908 = vmatprep.subr.mxu0 0.0
        %909 = vmatpush1.msra.mxu0 %v880
        %910 = vmatprep.subr.mxu0 0.0
        %911 = vmatpush1.msra.mxu0 %v879
        %912 = vmatprep.subr.mxu0 0.0
        %913 = vmatpush1.msra.mxu0 %v878
        %914 = vmatprep.subr.mxu0 0.0
        %915 = vmatpush1.msra.mxu0 %v877
        %916 = vmatprep.subr.mxu0 0.0
        %917 = vmatpush2.msra.mxu0 0.0
        %918 = vmatprep.subr.mxu0 0.0
        %919 = vmatpush2.msra.mxu0 0.0
        %920 = vmatprep.subr.mxu0 0.0
        %921 = vmatpush2.msra.mxu0 0.0
        %922 = vmatprep.subr.mxu0 0.0
        %923 = vmatpush2.msra.mxu0 0.0
        %924 = vmatprep.subr.mxu0 0.0
        %925 = vmatpush2.msra.mxu0 0.0
        %926 = vmatprep.subr.mxu0 0.0
        %927 = vmatpush2.msra.mxu0 0.0
        %928 = vmatprep.subr.mxu0 0.0
        %929 = vmatpush2.msra.mxu0 0.0
        %930 = vmatprep.subr.mxu0 0.0
        %931 = vmatpush2.msra.mxu0 0.0
        %932 = vmatprep.subr.mxu0 0.0
        %933 = vmatpush2.msra.mxu0 0.0
        %934 = vmatprep.subr.mxu0 0.0
        %935 = vmatpush2.msra.mxu0 0.0
        %936 = vmatprep.subr.mxu0 0.0
        %937 = vmatpush2.msra.mxu0 0.0
        %938 = vmatprep.subr.mxu0 0.0
        %939 = vmatpush2.msra.mxu0 0.0
        %940 = vmatprep.subr.mxu0 0.0
        %941 = vmatpush2.msra.mxu0 0.0
        %942 = vmatprep.subr.mxu0 0.0
        %943 = vmatpush2.msra.mxu0 0.0
        %944 = vmatprep.subr.mxu0 0.0
        %945 = vmatpush2.msra.mxu0 0.0
        %946 = vmatprep.subr.mxu0 0.0
        %947 = vmatpush2.msra.mxu0 0.0
        %948 = vmatprep.mubr.f32.mxu0 0.0
        %949 = vmatmul.mubr.f32.gmra.mxu0 %v882
        %v950 = vpop.f32.mrf.mxu0
        %v951 = vadd.f32 0.0, %v950
        %v952 = vpop.f32.mrf.mxu0
        %953 = vdwg.mxu0
        %v955 = vsel %vm425, %v419, 0
        %957 = vmatprep.subr.mxu0 0.0
        %958 = vmatpush1.msra.mxu0 0.0
        %959 = vmatprep.subr.mxu0 0.0
        %960 = vmatpush1.msra.mxu0 0.0
        %961 = vmatprep.subr.mxu0 0.0
        %962 = vmatpush1.msra.mxu0 0.0
        %963 = vmatprep.subr.mxu0 0.0
        %964 = vmatpush1.msra.mxu0 0.0
        %965 = vmatprep.subr.mxu0 0.0
        %966 = vmatpush1.msra.mxu0 0.0
        %967 = vmatprep.subr.mxu0 0.0
        %968 = vmatpush1.msra.mxu0 0.0
        %969 = vmatprep.subr.mxu0 0.0
        %970 = vmatpush1.msra.mxu0 0.0
        %971 = vmatprep.subr.mxu0 0.0
        %972 = vmatpush1.msra.mxu0 0.0
        %973 = vmatprep.subr.mxu0 0.0
        %974 = vmatpush1.msra.mxu0 0.0
        %975 = vmatprep.subr.mxu0 0.0
        %976 = vmatpush1.msra.mxu0 0.0
        %977 = vmatprep.subr.mxu0 0.0
        %978 = vmatpush1.msra.mxu0 0.0
        %979 = vmatprep.subr.mxu0 0.0
        %980 = vmatpush1.msra.mxu0 0.0
        %981 = vmatprep.subr.mxu0 0.0
        %982 = vmatpush1.msra.mxu0 %v876
        %983 = vmatprep.subr.mxu0 0.0
        %984 = vmatpush1.msra.mxu0 %v875
        %985 = vmatprep.subr.mxu0 0.0
        %986 = vmatpush1.msra.mxu0 %v874
        %987 = vmatprep.subr.mxu0 0.0
        %988 = vmatpush1.msra.mxu0 %v873
        %989 = vmatprep.subr.mxu0 0.0
        %990 = vmatpush2.msra.mxu0 0.0
        %991 = vmatprep.subr.mxu0 0.0
        %992 = vmatpush2.msra.mxu0 0.0
        %993 = vmatprep.subr.mxu0 0.0
        %994 = vmatpush2.msra.mxu0 0.0
        %995 = vmatprep.subr.mxu0 0.0
        %996 = vmatpush2.msra.mxu0 0.0
        %997 = vmatprep.subr.mxu0 0.0
        %998 = vmatpush2.msra.mxu0 0.0
        %999 = vmatprep.subr.mxu0 0.0
        %1000 = vmatpush2.msra.mxu0 0.0
        %1001 = vmatprep.subr.mxu0 0.0
        %1002 = vmatpush2.msra.mxu0 0.0
        %1003 = vmatprep.subr.mxu0 0.0
        %1004 = vmatpush2.msra.mxu0 0.0
        %1005 = vmatprep.subr.mxu0 0.0
        %1006 = vmatpush2.msra.mxu0 0.0
        %1007 = vmatprep.subr.mxu0 0.0
        %1008 = vmatpush2.msra.mxu0 0.0
        %1009 = vmatprep.subr.mxu0 0.0
        %1010 = vmatpush2.msra.mxu0 0.0
        %1011 = vmatprep.subr.mxu0 0.0
        %1012 = vmatpush2.msra.mxu0 0.0
        %1013 = vmatprep.subr.mxu0 0.0
        %1014 = vmatpush2.msra.mxu0 0.0
        %1015 = vmatprep.subr.mxu0 0.0
        %1016 = vmatpush2.msra.mxu0 0.0
        %1017 = vmatprep.subr.mxu0 0.0
        %1018 = vmatpush2.msra.mxu0 0.0
        %1019 = vmatprep.subr.mxu0 0.0
        %1020 = vmatpush2.msra.mxu0 0.0
        %1021 = vmatprep.mubr.f32.mxu0 0.0
        %1022 = vmatmul.mubr.f32.gmra.mxu0 %v955
        %v1023 = vpop.f32.mrf.mxu0
        %v1024 = vadd.f32 %v951, %v1023
        %v1025 = vpop.f32.mrf.mxu0
        %1026 = vdwg.mxu0
        %v1027 = vld [vmem:[%s6] sm:$0x1]
        %v1029 = vlaneseq
        %v1030 = vshrl.u32 %v1029, 7
        %v1031 = vsub.s32 0, %v1030
        %v1032 = vrot.slane %v1027, %v1031
        %v1034 = vadd.f32 %v1024, %v1032
        %v1035 = vxor.u32 %v1034, 2147483648
        %v1036 = vmul.f32 %v1035, 1.442695
        %v1037 = vpow.pop %v1036
        %v1038 = vadd.f32 %v1037, 1.0
        %v1039 = vrcp.pop %v1038
        %v1040 = vmul.f32 1.0, %v1039
        %v1041 = vmul.f32 %v1034, %v1040
        %v1042 = vld [vmem:[%s7] sm:$0xff]
        %v1043 = vld [vmem:[%s7 + $0x8] sm:$0xff]
        %v1044 = vld [vmem:[%s7 + $0x10] sm:$0xff]
        %v1045 = vld [vmem:[%s7 + $0x18] sm:$0xff]
        %v1046 = vld [vmem:[%s9] sm:$0x1]
        %v1048 = vlaneseq
        %v1049 = vshrl.u32 %v1048, 7
        %v1050 = vsub.s32 0, %v1049
        %v1051 = vrot.slane %v1046, %v1050
        %v1054 = vsel %vm425, %v1041, 0
        %1056 = vmatprep.subr.mxu0 0.0
        %1057 = vmatpush1.msra.mxu0 0.0
        %1058 = vmatprep.subr.mxu0 0.0
        %1059 = vmatpush1.msra.mxu0 0.0
        %1060 = vmatprep.subr.mxu0 0.0
        %1061 = vmatpush1.msra.mxu0 0.0
        %1062 = vmatprep.subr.mxu0 0.0
        %1063 = vmatpush1.msra.mxu0 0.0
        %1064 = vmatprep.subr.mxu0 0.0
        %1065 = vmatpush1.msra.mxu0 0.0
        %1066 = vmatprep.subr.mxu0 0.0
        %1067 = vmatpush1.msra.mxu0 0.0
        %1068 = vmatprep.subr.mxu0 0.0
        %1069 = vmatpush1.msra.mxu0 0.0
        %1070 = vmatprep.subr.mxu0 0.0
        %1071 = vmatpush1.msra.mxu0 0.0
        %1072 = vmatprep.subr.mxu0 0.0
        %1073 = vmatpush1.msra.mxu0 0.0
        %1074 = vmatprep.subr.mxu0 0.0
        %1075 = vmatpush1.msra.mxu0 0.0
        %1076 = vmatprep.subr.mxu0 0.0
        %1077 = vmatpush1.msra.mxu0 0.0
        %1078 = vmatprep.subr.mxu0 0.0
        %1079 = vmatpush1.msra.mxu0 0.0
        %1080 = vmatprep.subr.mxu0 0.0
        %1081 = vmatpush1.msra.mxu0 %v1045
        %1082 = vmatprep.subr.mxu0 0.0
        %1083 = vmatpush1.msra.mxu0 %v1044
        %1084 = vmatprep.subr.mxu0 0.0
        %1085 = vmatpush1.msra.mxu0 %v1043
        %1086 = vmatprep.subr.mxu0 0.0
        %1087 = vmatpush1.msra.mxu0 %v1042
        %1088 = vmatprep.subr.mxu0 0.0
        %1089 = vmatpush2.msra.mxu0 0.0
        %1090 = vmatprep.subr.mxu0 0.0
        %1091 = vmatpush2.msra.mxu0 0.0
        %1092 = vmatprep.subr.mxu0 0.0
        %1093 = vmatpush2.msra.mxu0 0.0
        %1094 = vmatprep.subr.mxu0 0.0
        %1095 = vmatpush2.msra.mxu0 0.0
        %1096 = vmatprep.subr.mxu0 0.0
        %1097 = vmatpush2.msra.mxu0 0.0
        %1098 = vmatprep.subr.mxu0 0.0
        %1099 = vmatpush2.msra.mxu0 0.0
        %1100 = vmatprep.subr.mxu0 0.0
        %1101 = vmatpush2.msra.mxu0 0.0
        %1102 = vmatprep.subr.mxu0 0.0
        %1103 = vmatpush2.msra.mxu0 0.0
        %1104 = vmatprep.subr.mxu0 0.0
        %1105 = vmatpush2.msra.mxu0 0.0
        %1106 = vmatprep.subr.mxu0 0.0
        %1107 = vmatpush2.msra.mxu0 0.0
        %1108 = vmatprep.subr.mxu0 0.0
        %1109 = vmatpush2.msra.mxu0 0.0
        %1110 = vmatprep.subr.mxu0 0.0
        %1111 = vmatpush2.msra.mxu0 0.0
        %1112 = vmatprep.subr.mxu0 0.0
        %1113 = vmatpush2.msra.mxu0 0.0
        %1114 = vmatprep.subr.mxu0 0.0
        %1115 = vmatpush2.msra.mxu0 0.0
        %1116 = vmatprep.subr.mxu0 0.0
        %1117 = vmatpush2.msra.mxu0 0.0
        %1118 = vmatprep.subr.mxu0 0.0
        %1119 = vmatpush2.msra.mxu0 0.0
        %1120 = vmatprep.mubr.f32.mxu0 0.0
        %1121 = vmatmul.mubr.f32.gmra.mxu0 %v1054
        %v1122 = vpop.f32.mrf.mxu0
        %v1123 = vadd.f32 %v1051, %v1122
        %v1124 = vpop.f32.mrf.mxu0
        %1125 = vdwg.mxu0
        %v1126 = vld [vmem:[%s8] sm:$0xff]
        %v1127 = vld [vmem:[%s8 + $0x8] sm:$0xff]
        %v1128 = vld [vmem:[%s8 + $0x10] sm:$0xff]
        %v1129 = vld [vmem:[%s8 + $0x18] sm:$0xff]
        %v1130 = vld [vmem:[%s10] sm:$0x1]
        %v1132 = vlaneseq
        %v1133 = vshrl.u32 %v1132, 7
        %v1134 = vsub.s32 0, %v1133
        %v1135 = vrot.slane %v1130, %v1134
        %1137 = vmatprep.subr.mxu0 0.0
        %1138 = vmatpush1.msra.mxu0 0.0
        %1139 = vmatprep.subr.mxu0 0.0
        %1140 = vmatpush1.msra.mxu0 0.0
        %1141 = vmatprep.subr.mxu0 0.0
        %1142 = vmatpush1.msra.mxu0 0.0
        %1143 = vmatprep.subr.mxu0 0.0
        %1144 = vmatpush1.msra.mxu0 0.0
        %1145 = vmatprep.subr.mxu0 0.0
        %1146 = vmatpush1.msra.mxu0 0.0
        %1147 = vmatprep.subr.mxu0 0.0
        %1148 = vmatpush1.msra.mxu0 0.0
        %1149 = vmatprep.subr.mxu0 0.0
        %1150 = vmatpush1.msra.mxu0 0.0
        %1151 = vmatprep.subr.mxu0 0.0
        %1152 = vmatpush1.msra.mxu0 0.0
        %1153 = vmatprep.subr.mxu0 0.0
        %1154 = vmatpush1.msra.mxu0 0.0
        %1155 = vmatprep.subr.mxu0 0.0
        %1156 = vmatpush1.msra.mxu0 0.0
        %1157 = vmatprep.subr.mxu0 0.0
        %1158 = vmatpush1.msra.mxu0 0.0
        %1159 = vmatprep.subr.mxu0 0.0
        %1160 = vmatpush1.msra.mxu0 0.0
        %1161 = vmatprep.subr.mxu0 0.0
        %1162 = vmatpush1.msra.mxu0 %v1129
        %1163 = vmatprep.subr.mxu0 0.0
        %1164 = vmatpush1.msra.mxu0 %v1128
        %1165 = vmatprep.subr.mxu0 0.0
        %1166 = vmatpush1.msra.mxu0 %v1127
        %1167 = vmatprep.subr.mxu0 0.0
        %1168 = vmatpush1.msra.mxu0 %v1126
        %1169 = vmatprep.subr.mxu0 0.0
        %1170 = vmatpush2.msra.mxu0 0.0
        %1171 = vmatprep.subr.mxu0 0.0
        %1172 = vmatpush2.msra.mxu0 0.0
        %1173 = vmatprep.subr.mxu0 0.0
        %1174 = vmatpush2.msra.mxu0 0.0
        %1175 = vmatprep.subr.mxu0 0.0
        %1176 = vmatpush2.msra.mxu0 0.0
        %1177 = vmatprep.subr.mxu0 0.0
        %1178 = vmatpush2.msra.mxu0 0.0
        %1179 = vmatprep.subr.mxu0 0.0
        %1180 = vmatpush2.msra.mxu0 0.0
        %1181 = vmatprep.subr.mxu0 0.0
        %1182 = vmatpush2.msra.mxu0 0.0
        %1183 = vmatprep.subr.mxu0 0.0
        %1184 = vmatpush2.msra.mxu0 0.0
        %1185 = vmatprep.subr.mxu0 0.0
        %1186 = vmatpush2.msra.mxu0 0.0
        %1187 = vmatprep.subr.mxu0 0.0
        %1188 = vmatpush2.msra.mxu0 0.0
        %1189 = vmatprep.subr.mxu0 0.0
        %1190 = vmatpush2.msra.mxu0 0.0
        %1191 = vmatprep.subr.mxu0 0.0
        %1192 = vmatpush2.msra.mxu0 0.0
        %1193 = vmatprep.subr.mxu0 0.0
        %1194 = vmatpush2.msra.mxu0 0.0
        %1195 = vmatprep.subr.mxu0 0.0
        %1196 = vmatpush2.msra.mxu0 0.0
        %1197 = vmatprep.subr.mxu0 0.0
        %1198 = vmatpush2.msra.mxu0 0.0
        %1199 = vmatprep.subr.mxu0 0.0
        %1200 = vmatpush2.msra.mxu0 0.0
        %1201 = vmatprep.mubr.f32.mxu0 0.0
        %1202 = vmatmul.mubr.f32.gmra.mxu0 %v1054
        %v1203 = vpop.f32.mrf.mxu0
        %v1204 = vadd.f32 %v1135, %v1203
        %v1205 = vpop.f32.mrf.mxu0
        %1206 = vdwg.mxu0
        %v1207 = vmul.f32 %v1204, %v570
        %v1208 = vmul.f32 %v1204, %v715
        %v1209 = vmul.f32 %v1204, %v861
        %1211 = vrot.lane.b32.xlu0 %v1207, 16
        %v1212 = vpop.permute.xlu0 %1211
        %1215 = vrot.lane.b32.xlu0 %v1208, 32
        %v1216 = vpop.permute.xlu0 %1215
        %1219 = vrot.lane.b32.xlu0 %v1209, 48
        %v1220 = vpop.permute.xlu0 %1219
        %vm1222 = vcmask 130048
        %v1223 = vsel %vm1222, %v1123, %v1212
        %v1224 = vsel %vm425, %v1223, %v1216
        %vm1225 = vcmask 392192
        %v1226 = vsel %vm1225, %v1224, %v1220
        %vm1227 = vcmask 523264
        %1228 = vst.msk [vmem:[%s414] sm:$0xff] %vm1227, %v1226
        %s1229 = sand.u32 %s277, 1
        %s1230 = scalar_lea.sflag [#allocation4], %s1229
        %s1231 = sand.u32 %s277, 1
        %s1232 = smul.addr %s1231, 8
        %s1233 = scalar_lea.vmem [#allocation5], %s1232
        // Predicated region
        $region69: #{tpu_custom_call.1} parent=63 // pred_check
          %p1234 = pneg %p287
        $region70: #{tpu_custom_call.1} parent=63 // pred_check_branch
          %1236 = sbr.rel (%p1234) target = $region72
        $region71: #{tpu_custom_call.1} parent=63 // pred_region
          %s1238 = ssub.s32 128, 128
          %1239 = vsyncadd %s1230, %s1238
          %s1240 = smul.addr %s28, 128
          %s1241 = scalar_lea.hbm %s11, %s1240
          %s1243 = sshll.u32 %s1233, 4
          %s1244 = int_to_ptr.vmem [resolvable:$true] %s1243
          %1246 = dma.vmem_to_hbm [thread:$0]  %s1244, 128, %s1241, %s1230
        $region72: #{tpu_custom_call.1} parent=63 // pred_fallthru
          _
      $region64: #{tpu_custom_call.1} parent=5 // pred_fallthru
        _
      %p1247 = scmp.le.s32.totalorder 2, %s23
      // Predicated region
      $region73: #{tpu_custom_call.1} parent=5 // pred_check
        %p1248 = pneg %p1247
      $region74: #{tpu_custom_call.1} parent=5 // pred_check_branch
        %1250 = sbr.rel (%p1248) target = $region76
      $region75: #{tpu_custom_call.1} parent=5 // pred_region
        %s1251 = ssub.s32 %s23, 2
        // Predicated region
        $region77: #{tpu_custom_call.1} parent=75 // pred_check
          %p1252 = pneg %p293
        $region78: #{tpu_custom_call.1} parent=75 // pred_check_branch
          %1254 = sbr.rel (%p1252) target = $region80
        $region79: #{tpu_custom_call.1} parent=75 // pred_region
          %s1255 = sand.u32 %s278, 1
          %s1256 = scalar_lea.sflag [#allocation4], %s1255
          %s1257 = sand.u32 %s278, 1
          %s1258 = smul.addr %s1257, 8
          %s1259 = scalar_lea.vmem [#allocation5], %s1258
          %1260 = dma.done %s1256, 128
        $region80: #{tpu_custom_call.1} parent=75 // pred_fallthru
          _
      $region76: #{tpu_custom_call.1} parent=5 // pred_fallthru
        _
    $region6: #{tpu_custom_call.1} parent=1 // loop_footer
      %s27 = sadd.s32 1, %s23
    $region7: #{tpu_custom_call.1} parent=1 // loop_footer_branch
      %22 = sbr.rel target = $region3
    $region8: #{tpu_custom_call.1} parent=1 // loop_exit
      _
    %1261 = vsyncpa [#allocation3], 1
    %s1262 = scalar_lea.sflag [#allocation3], 1
    %1263 = vsyncpa %s1262, 1
    %1264 = vsyncpa [#allocation4], 1
    %s1265 = scalar_lea.sflag [#allocation4], 1
    %1266 = vsyncpa %s1265, 1

</llo_original>
